<compile_context>
chip_gen: v6e
topology: v6e:2x2x1
jax: 0.10.0
libtpu: 0.0.40
codegen_flags: <defaults>
</compile_context>

<pallas_src>
import functools

import jax
import jax.numpy as jnp
from jax.experimental import pallas as pl
from jax.experimental.pallas import tpu as pltpu


def _round_up(x, m):
    return (x + m - 1) // m * m


# ----------------------------------------------------------------------------
# Pallas kernel: one (batch element, query tile) per grid step
# ----------------------------------------------------------------------------
def encoder_layer_kernel(x_ref, npm_ref, kbias_ref,
                         wq_ref, bq_ref, wk_ref, bk_ref, wv_ref, bv_ref,
                         wo_ref, bo_ref, ln1g_ref, ln1b_ref,
                         w1_ref, b1_ref, w2_ref, b2_ref,
                         ln2g_ref, ln2b_ref,
                         o_ref,
                         k_scr, v_scr,
                         *, n_head, d_k, d_v, d_model):
    qi = pl.program_id(1)
    L_pad = x_ref.shape[1]
    D_pad = x_ref.shape[2]
    TQ = o_ref.shape[1]
    HDV_pad = v_scr.shape[1]
    f32, bf16 = jnp.float32, jnp.bfloat16

    # ---- fused K / V projections: once per batch element, into VMEM scratch --
    @pl.when(qi == 0)
    def _():
        x_full = x_ref[0]                                              # (L, D) bf16
        k_all = jnp.dot(x_full, wk_ref[...],
                        preferred_element_type=f32) + bk_ref[...]      # (L, H*dk_p)
        v_all = jnp.dot(x_full, wv_ref[...],
                        preferred_element_type=f32) + bv_ref[...]      # (L, H*dv_p)
        k_scr[...] = k_all.astype(bf16)
        v_scr[...] = v_all.astype(bf16)

    # ---- fused Q projection for this query tile ----------------------------
    q_start = pl.multiple_of(qi * TQ, TQ)
    xq_bf = x_ref[0, pl.ds(q_start, TQ), :]                            # (TQ, D) bf16
    xq_f32 = xq_bf.astype(f32)                                         # residual copy
    q_all = (jnp.dot(xq_bf, wq_ref[...], preferred_element_type=f32)
             + bq_ref[...]).astype(bf16)                               # (TQ, H*dk_p)

    k_all = k_scr[...]                                                 # (L, H*dk_p)
    v_all = v_scr[...]                                                 # (L, H*dv_p)
    kbias = kbias_ref[0]                                               # (1, L) additive

    # ---- per-head scaled-dot-product attention (static unroll over heads) --
    inv_temp = 1.0 / (float(d_k) ** 0.5)
    ctx_parts = []
    for h in range(n_head):
        q_h = jax.lax.slice_in_dim(q_all, h * d_k, (h + 1) * d_k, axis=1)
        k_h = jax.lax.slice_in_dim(k_all, h * d_k, (h + 1) * d_k, axis=1)
        v_h = jax.lax.slice_in_dim(v_all, h * d_v, (h + 1) * d_v, axis=1)
        s = jax.lax.dot_general(q_h, k_h, (((1,), (1,)), ((), ())),
                                preferred_element_type=f32)            # (TQ, L)
        s = s * inv_temp + kbias                # additive mask: 0 keep / -1e30
        m = jnp.max(s, axis=-1, keepdims=True)
        e = jnp.exp(s - m)
        denom = jnp.sum(e, axis=-1, keepdims=True)
        p = e * pl.reciprocal(denom, approx=True)                      # softmax
        # attention dropout: identity in eval mode
        ctx_parts.append(jnp.dot(p.astype(bf16), v_h,
                                 preferred_element_type=f32).astype(bf16))

    # ---- output projection: one fused matmul over (head, d_v) --------------
    pad_w = HDV_pad - n_head * d_v
    if pad_w > 0:                       # matching wo rows are zero-padded
        ctx_parts.append(jnp.zeros((TQ, pad_w), bf16))
    ctx_all = jnp.concatenate(ctx_parts, axis=1)                       # (TQ, HDV_p)
    proj = jnp.dot(ctx_all, wo_ref[...],
                   preferred_element_type=f32) + bo_ref[...]           # (TQ, D)
    # dropout: identity in eval mode

    # ---- LayerNorm over the REAL d_model channels (padded channels are 0) --
    fmask = (jax.lax.broadcasted_iota(jnp.int32, (1, D_pad), 1)
             < d_model).astype(f32)
    inv_d = 1.0 / float(d_model)

    def layer_norm(t, g, b):
        mean = jnp.sum(t, axis=-1, keepdims=True) * inv_d
        cen = (t - mean) * fmask
        var = jnp.sum(cen * cen, axis=-1, keepdims=True) * inv_d
        return cen * jax.lax.rsqrt(var + 1e-5) * g + b

    npm = npm_ref[0]                                                   # (TQ, 1)
    y = layer_norm(proj + xq_f32, ln1g_ref[...], ln1b_ref[...]) * npm

    # ---- position-wise FFN (1x1 convs == per-token linears) ----------------
    h1 = jnp.dot(y.astype(bf16), w1_ref[...],
                 preferred_element_type=f32) + b1_ref[...]
    h1 = jnp.maximum(h1, 0.0)                                          # ReLU
    ff = jnp.dot(h1.astype(bf16), w2_ref[...],
                 preferred_element_type=f32) + b2_ref[...]
    # dropout: identity in eval mode
    z = layer_norm(ff + y, ln2g_ref[...], ln2b_ref[...]) * npm

    o_ref[0] = z.astype(o_ref.dtype)


# ----------------------------------------------------------------------------
# Weight re-layout / padding (done ONCE for all layers, outside the layer loop)
# ----------------------------------------------------------------------------
def prep_layer_params(p, *, D_pad, DI_pad, HDK_pad, HDV_pad):
    f32, bf16 = jnp.float32, jnp.bfloat16

    def pad2(a, shape, dtype):
        return jnp.pad(a, [(0, s - d) for d, s in zip(a.shape, shape)]).astype(dtype)

    # LN gamma/beta, biases and the padded rows/cols of wo/w1/w2 are ZERO-padded
    # so padded feature channels stay exactly zero through the residual stream.
    return [
        pad2(p["wq"], (D_pad, HDK_pad), bf16),
        pad2(p["bq"], (1, HDK_pad), f32),
        pad2(p["wk"], (D_pad, HDK_pad), bf16),
        pad2(p["bk"], (1, HDK_pad), f32),
        pad2(p["wv"], (D_pad, HDV_pad), bf16),
        pad2(p["bv"], (1, HDV_pad), f32),
        pad2(p["wo"], (HDV_pad, D_pad), bf16),
        pad2(p["bo"], (1, D_pad), f32),
        pad2(p["ln1_g"], (1, D_pad), f32),
        pad2(p["ln1_b"], (1, D_pad), f32),
        pad2(p["w1"], (D_pad, DI_pad), bf16),
        pad2(p["b1"], (1, DI_pad), f32),
        pad2(p["w2"], (DI_pad, D_pad), bf16),
        pad2(p["b2"], (1, D_pad), f32),
        pad2(p["ln2_g"], (1, D_pad), f32),
        pad2(p["ln2_b"], (1, D_pad), f32),
    ]


def encoder_layer_pallas(x, npm, kbias, weights, *, n_head, d_k, d_v, d_model,
                         tile_q, vmem_limit_bytes):
    B, L_pad, D_pad = x.shape
    HDK_pad = weights[0].shape[1]
    HDV_pad = weights[4].shape[1]
    n_q = L_pad // tile_q

    kernel = functools.partial(encoder_layer_kernel, n_head=n_head, d_k=d_k,
                               d_v=d_v, d_model=d_model)

    in_specs = [
        pl.BlockSpec((1, L_pad, D_pad), lambda b, q: (b, 0, 0)),   # x (full seq, bf16)
        pl.BlockSpec((1, tile_q, 1), lambda b, q: (b, q, 0)),      # non_pad_mask
        pl.BlockSpec((1, 1, L_pad), lambda b, q: (b, 0, 0)),       # key bias
    ] + [pl.BlockSpec(w.shape, lambda b, q: (0, 0)) for w in weights]

    return pl.pallas_call(
        kernel,
        out_shape=jax.ShapeDtypeStruct((B, L_pad, D_pad), jnp.bfloat16),
        grid=(B, n_q),
        in_specs=in_specs,
        out_specs=pl.BlockSpec((1, tile_q, D_pad), lambda b, q: (b, q, 0)),
        scratch_shapes=[pltpu.VMEM((L_pad, HDK_pad), jnp.bfloat16),   # fused K
                        pltpu.VMEM((L_pad, HDV_pad), jnp.bfloat16)],  # fused V
        compiler_params=pltpu.CompilerParams(
            dimension_semantics=("parallel", "arbitrary"),
            vmem_limit_bytes=vmem_limit_bytes),
    )(x, npm, kbias, *weights)


def trans_encoder_pallas(enc_output, non_pad_mask, slf_attn_mask, layer_params,
                         *, n_head, d_k, d_v):
    """Forward pass of Trans_Encoder (return_attns=False)."""
    B, L, d_model = enc_output.shape
    d_inner = layer_params[0]["w1"].shape[1]

    D_pad = _round_up(d_model, 128)
    DI_pad = _round_up(d_inner, 128)
    HDK_pad = _round_up(n_head * d_k, 128)
    HDV_pad = _round_up(n_head * d_v, 128)
    if L > 128:
        L_pad, tile_q = _round_up(L, 128), 128
        # TODO(synk): tile_q=256 on v5e/v6e (128 MiB VMEM) when it fits.
    else:
        L_pad = _round_up(L, 8)
        tile_q = L_pad

    # Activations cross HBM in bf16; in-kernel LN / softmax / residual math is
    # f32.  Padded channels are zero so masked LayerNorm stays exact.
    x = jnp.pad(enc_output, ((0, 0), (0, L_pad - L), (0, D_pad - d_model))
                ).astype(jnp.bfloat16)
    npm = jnp.pad(non_pad_mask.astype(jnp.float32),
                  ((0, 0), (0, L_pad - L), (0, 0)))
    # CosmosQA's slf_attn_mask is a key-padding mask broadcast over queries;
    # compress to (B, L) and convert to an additive bias (0 keep / -1e30 mask).
    key_pad = slf_attn_mask[:, 0, :] if slf_attn_mask.ndim == 3 else slf_attn_mask
    key_pad = jnp.pad(key_pad.astype(jnp.float32), ((0, 0), (0, L_pad - L)),
                      constant_values=1.0)            # padded keys are masked
    kbias = (key_pad * -1e30)[:, None, :]             # (B, 1, L_pad)

    # Weight prep hoisted out of the layer loop (constants per forward pass).
    prepped = [prep_layer_params(p, D_pad=D_pad, DI_pad=DI_pad,
                                 HDK_pad=HDK_pad, HDV_pad=HDV_pad)
               for p in layer_params]

    # VMEM budget derived from the actual block sizes (x2 for default double
    # buffering) + fused K/V scratch + headroom for in-kernel intermediates.
    w_bytes = sum(int(w.size) * w.dtype.itemsize for w in prepped[0])
    x_blk = L_pad * D_pad * 2
    o_blk = tile_q * D_pad * 2
    scr = L_pad * (HDK_pad + HDV_pad) * 2
    inter = tile_q * (L_pad + DI_pad + 6 * D_pad + HDK_pad + HDV_pad) * 4
    est = 2 * (w_bytes + x_blk + o_blk) + scr + inter
    vmem_limit = int(min(max(est + (16 << 20), 32 << 20), 110 << 20))
    # TODO(synk): on v7x (64 MiB physical VMEM) long-L configs additionally
    # need flash-style KV tiling and single-buffered weight blocks.

    for w in prepped:                                  # layers run sequentially
        x = encoder_layer_pallas(x, npm, kbias, w, n_head=n_head, d_k=d_k,
                                 d_v=d_v, d_model=d_model, tile_q=tile_q,
                                 vmem_limit_bytes=vmem_limit)
    # TODO(synk): cross-call weight prefetch (P10) / fused multi-layer grid to
    # hide inter-layer weight DMA and the activation HBM round-trip.
    return x[:, :L, :d_model].astype(jnp.float32)


# ----------------------------------------------------------------------------
# Deterministic synthetic parameter init (shapes follow the PyTorch __init__)
# ----------------------------------------------------------------------------
def init_layer_params(key, d_model, d_inner, n_head, d_k, d_v):
    ks = jax.random.split(key, 6)

    def normal(k, shape, std):
        return jax.random.normal(k, shape, jnp.float32) * std

    return {
        "wq": normal(ks[0], (d_model, n_head * d_k), (2.0 / (d_model + d_k)) ** 0.5),
        "bq": jnp.zeros((1, n_head * d_k), jnp.float32),
        "wk": normal(ks[1], (d_model, n_head * d_k), (2.0 / (d_model + d_k)) ** 0.5),
        "bk": jnp.zeros((1, n_head * d_k), jnp.float32),
        "wv": normal(ks[2], (d_model, n_head * d_v), (2.0 / (d_model + d_v)) ** 0.5),
        "bv": jnp.zeros((1, n_head * d_v), jnp.float32),
        "wo": normal(ks[3], (n_head * d_v, d_model), (2.0 / (n_head * d_v + d_model)) ** 0.5),
        "bo": jnp.zeros((1, d_model), jnp.float32),
        "ln1_g": jnp.ones((1, d_model), jnp.float32),
        "ln1_b": jnp.zeros((1, d_model), jnp.float32),
        "w1": normal(ks[4], (d_model, d_inner), (2.0 / (d_model + d_inner)) ** 0.5),
        "b1": jnp.zeros((1, d_inner), jnp.float32),
        "w2": normal(ks[5], (d_inner, d_model), (2.0 / (d_model + d_inner)) ** 0.5),
        "b2": jnp.zeros((1, d_model), jnp.float32),
        "ln2_g": jnp.ones((1, d_model), jnp.float32),
        "ln2_b": jnp.zeros((1, d_model), jnp.float32),
    }


# ----------------------------------------------------------------------------
# Pure-JAX reference (PyTorch forward; bf16 matmul operands with f32
# accumulation to mirror the kernel's MXU policy; f32 activation stream)
# ----------------------------------------------------------------------------
def ref_encoder_layer(x, npm, mask, p, n_head, d_k, d_v):
    B, L, D = x.shape
    bf = jnp.bfloat16

    def mm(a, w):
        return jnp.einsum("...ld,df->...lf", a.astype(bf), w.astype(bf),
                          preferred_element_type=jnp.float32)

    q = (mm(x, p["wq"]) + p["bq"]).reshape(B, L, n_head, d_k).transpose(0, 2, 1, 3)
    k = (mm(x, p["wk"]) + p["bk"]).reshape(B, L, n_head, d_k).transpose(0, 2, 1, 3)
    v = (mm(x, p["wv"]) + p["bv"]).reshape(B, L, n_head, d_v).transpose(0, 2, 1, 3)
    scores = jnp.einsum("bhqd,bhkd->bhqk", q.astype(bf), k.astype(bf),
                        preferred_element_type=jnp.float32) / (float(d_k) ** 0.5)
    scores = jnp.where(mask[:, None, :, :] > 0.0, -jnp.inf, scores)
    attn = jax.nn.softmax(scores, axis=-1)
    o = jnp.einsum("bhqk,bhkd->bhqd", attn.astype(bf), v.astype(bf),
                   preferred_element_type=jnp.float32).transpose(0, 2, 1, 3)
    o = mm(o.reshape(B, L, n_head * d_v), p["wo"]) + p["bo"]

    def ln(t, g, b, eps=1e-5):
        m = jnp.mean(t, -1, keepdims=True)
        va = jnp.mean(jnp.square(t - m), -1, keepdims=True)
        return (t - m) * jax.lax.rsqrt(va + eps) * g + b

    y = ln(o + x, p["ln1_g"], p["ln1_b"]) * npm
    h1 = jnp.maximum(mm(y, p["w1"]) + p["b1"], 0.0)
    f = mm(h1, p["w2"]) + p["b2"]
    z = ln(f + y, p["ln2_g"], p["ln2_b"]) * npm
    return z


def ref_trans_encoder(x, npm, mask, layer_params, n_head, d_k, d_v):
    for p in layer_params:
        x = ref_encoder_layer(x, npm, mask, p, n_head, d_k, d_v)
    return x


# ----------------------------------------------------------------------------
if __name__ == "__main__":
    n_layers, n_head, d_k, d_v = 2, 2, 16, 16
    d_model, d_inner = 32, 64
    B, L = 2, 8

    root = jax.random.PRNGKey(0)
    k_in, k_par = jax.random.split(root)

    enc_output = jax.random.normal(k_in, (B, L, d_model), jnp.float32)

    # per-example valid lengths -> masks (same API as the PyTorch module)
    lengths = jnp.array([8, 6], dtype=jnp.int32)
    pos = jnp.arange(L)
    valid = (pos[None, :] < lengths[:, None]).astype(jnp.float32)      # (B, L)
    non_pad_mask = valid[:, :, None]                                   # (B, L, 1)
    slf_attn_mask = jnp.broadcast_to(
        (1.0 - valid)[:, None, :], (B, L, L)).astype(jnp.float32)      # (B, L, L)

    layer_keys = jax.random.split(k_par, n_layers)
    layer_params = [init_layer_params(k, d_model, d_inner, n_head, d_k, d_v)
                    for k in layer_keys]

    out = trans_encoder_pallas(enc_output, non_pad_mask, slf_attn_mask,
                               layer_params, n_head=n_head, d_k=d_k, d_v=d_v)
    out = jax.block_until_ready(out)

    ref = ref_trans_encoder(enc_output, non_pad_mask, slf_attn_mask,
                            layer_params, n_head, d_k, d_v)
    assert out.shape == (B, L, d_model)
    # bf16 activation I/O (declared policy) + bf16 MXU operands + approx
    # softmax reciprocal => compare at 3e-2; real bugs show up at O(0.1-1).
    assert jnp.allclose(out, ref, atol=3e-2, rtol=3e-2), "mismatch vs reference"

    print("KERNEL_OK")
</pallas_src>

<mosaic_0001>
module attributes {stable_mosaic.version = 11 : i64} {
  func.func @encoder_layer_kernel(%arg0: i32, %arg1: i32, %arg2: memref<1x8x128xbf16, #tpu.memory_space<vmem>>, %arg3: memref<1x8x1xf32, #tpu.memory_space<vmem>>, %arg4: memref<1x1x8xf32, #tpu.memory_space<vmem>>, %arg5: memref<128x128xbf16, #tpu.memory_space<vmem>>, %arg6: memref<1x128xf32, #tpu.memory_space<vmem>>, %arg7: memref<128x128xbf16, #tpu.memory_space<vmem>>, %arg8: memref<1x128xf32, #tpu.memory_space<vmem>>, %arg9: memref<128x128xbf16, #tpu.memory_space<vmem>>, %arg10: memref<1x128xf32, #tpu.memory_space<vmem>>, %arg11: memref<128x128xbf16, #tpu.memory_space<vmem>>, %arg12: memref<1x128xf32, #tpu.memory_space<vmem>>, %arg13: memref<1x128xf32, #tpu.memory_space<vmem>>, %arg14: memref<1x128xf32, #tpu.memory_space<vmem>>, %arg15: memref<128x128xbf16, #tpu.memory_space<vmem>>, %arg16: memref<1x128xf32, #tpu.memory_space<vmem>>, %arg17: memref<128x128xbf16, #tpu.memory_space<vmem>>, %arg18: memref<1x128xf32, #tpu.memory_space<vmem>>, %arg19: memref<1x128xf32, #tpu.memory_space<vmem>>, %arg20: memref<1x128xf32, #tpu.memory_space<vmem>>, %arg21: memref<1x8x128xbf16, #tpu.memory_space<vmem>>, %arg22: memref<8x128xbf16, #tpu.memory_space<vmem>>, %arg23: memref<8x128xbf16, #tpu.memory_space<vmem>>) attributes {dimension_semantics = [#tpu.dimension_semantics<parallel>, #tpu.dimension_semantics<arbitrary>], iteration_bounds = array<i64: 2, 1>, scalar_prefetch = 0 : i64, scratch_operands = 2 : i64, tpu.core_type = #tpu.core_type<tc>, window_params = [{transform_indices = @transform_0, window_bounds = array<i64: 1, 8, 128>}, {transform_indices = @transform_1, window_bounds = array<i64: 1, 8, 1>}, {transform_indices = @transform_2, window_bounds = array<i64: 1, 1, 8>}, {pipeline_mode = #tpu.pipeline_mode<synchronous>, transform_indices = @transform_3, window_bounds = array<i64: 128, 128>}, {pipeline_mode = #tpu.pipeline_mode<synchronous>, transform_indices = @transform_4, window_bounds = array<i64: 1, 128>}, {pipeline_mode = #tpu.pipeline_mode<synchronous>, transform_indices = @transform_5, window_bounds = array<i64: 128, 128>}, {pipeline_mode = #tpu.pipeline_mode<synchronous>, transform_indices = @transform_6, window_bounds = array<i64: 1, 128>}, {pipeline_mode = #tpu.pipeline_mode<synchronous>, transform_indices = @transform_7, window_bounds = array<i64: 128, 128>}, {pipeline_mode = #tpu.pipeline_mode<synchronous>, transform_indices = @transform_8, window_bounds = array<i64: 1, 128>}, {pipeline_mode = #tpu.pipeline_mode<synchronous>, transform_indices = @transform_9, window_bounds = array<i64: 128, 128>}, {pipeline_mode = #tpu.pipeline_mode<synchronous>, transform_indices = @transform_10, window_bounds = array<i64: 1, 128>}, {pipeline_mode = #tpu.pipeline_mode<synchronous>, transform_indices = @transform_11, window_bounds = array<i64: 1, 128>}, {pipeline_mode = #tpu.pipeline_mode<synchronous>, transform_indices = @transform_12, window_bounds = array<i64: 1, 128>}, {pipeline_mode = #tpu.pipeline_mode<synchronous>, transform_indices = @transform_13, window_bounds = array<i64: 128, 128>}, {pipeline_mode = #tpu.pipeline_mode<synchronous>, transform_indices = @transform_14, window_bounds = array<i64: 1, 128>}, {pipeline_mode = #tpu.pipeline_mode<synchronous>, transform_indices = @transform_15, window_bounds = array<i64: 128, 128>}, {pipeline_mode = #tpu.pipeline_mode<synchronous>, transform_indices = @transform_16, window_bounds = array<i64: 1, 128>}, {pipeline_mode = #tpu.pipeline_mode<synchronous>, transform_indices = @transform_17, window_bounds = array<i64: 1, 128>}, {pipeline_mode = #tpu.pipeline_mode<synchronous>, transform_indices = @transform_18, window_bounds = array<i64: 1, 128>}, {transform_indices = @transform_19, window_bounds = array<i64: 1, 8, 128>}]} {
    %c0_i32 = arith.constant 0 : i32
    %0 = arith.cmpi eq, %arg1, %c0_i32 : i32
    %1 = arith.extui %0 : i1 to i32
    %c0_i32_0 = arith.constant 0 : i32
    %2 = arith.cmpi ne, %1, %c0_i32_0 : i32
    scf.if %2 {
      %c0_64 = arith.constant 0 : index
      %c0_65 = arith.constant 0 : index
      %c0_66 = arith.constant 0 : index
      %147 = vector.load %arg2[%c0_64, %c0_65, %c0_66] : memref<1x8x128xbf16, #tpu.memory_space<vmem>>, vector<1x8x128xbf16>
      %148 = vector.shape_cast %147 : vector<1x8x128xbf16> to vector<8x128xbf16>
      %c0_67 = arith.constant 0 : index
      %c0_68 = arith.constant 0 : index
      %149 = vector.load %arg7[%c0_67, %c0_68] : memref<128x128xbf16, #tpu.memory_space<vmem>>, vector<128x128xbf16>
      %cst_69 = arith.constant dense<0.000000e+00> : vector<8x128xf32>
      %150 = tpu.matmul %148, %149, %cst_69 {dimension_numbers = #tpu.dot_dimension_numbers<[1], [0], [0], [1], [0, 0, 1, 1], [], []>} : vector<8x128xbf16>, vector<128x128xbf16>, vector<8x128xf32> -> vector<8x128xf32>
      %c0_70 = arith.constant 0 : index
      %c0_71 = arith.constant 0 : index
      %151 = vector.load %arg8[%c0_70, %c0_71] : memref<1x128xf32, #tpu.memory_space<vmem>>, vector<1x128xf32>
      %152 = vector.broadcast %151 : vector<1x128xf32> to vector<8x128xf32>
      %153 = arith.addf %150, %152 : vector<8x128xf32>
      %c0_72 = arith.constant 0 : index
      %c0_73 = arith.constant 0 : index
      %154 = vector.load %arg9[%c0_72, %c0_73] : memref<128x128xbf16, #tpu.memory_space<vmem>>, vector<128x128xbf16>
      %cst_74 = arith.constant dense<0.000000e+00> : vector<8x128xf32>
      %155 = tpu.matmul %148, %154, %cst_74 {dimension_numbers = #tpu.dot_dimension_numbers<[1], [0], [0], [1], [0, 0, 1, 1], [], []>} : vector<8x128xbf16>, vector<128x128xbf16>, vector<8x128xf32> -> vector<8x128xf32>
      %c0_75 = arith.constant 0 : index
      %c0_76 = arith.constant 0 : index
      %156 = vector.load %arg10[%c0_75, %c0_76] : memref<1x128xf32, #tpu.memory_space<vmem>>, vector<1x128xf32>
      %157 = vector.broadcast %156 : vector<1x128xf32> to vector<8x128xf32>
      %158 = arith.addf %155, %157 : vector<8x128xf32>
      %159 = arith.truncf %153 : vector<8x128xf32> to vector<8x128xbf16>
      %c0_77 = arith.constant 0 : index
      %c0_78 = arith.constant 0 : index
      %160 = vector.load %arg22[%c0_77, %c0_78] : memref<8x128xbf16, #tpu.memory_space<vmem>>, vector<8x128xbf16>
      tpu.vector_store %arg22[%c0_77, %c0_78], %159 {strides = array<i32>} : memref<8x128xbf16, #tpu.memory_space<vmem>>, vector<8x128xbf16>,
      %161 = arith.truncf %158 : vector<8x128xf32> to vector<8x128xbf16>
      %c0_79 = arith.constant 0 : index
      %c0_80 = arith.constant 0 : index
      %162 = vector.load %arg23[%c0_79, %c0_80] : memref<8x128xbf16, #tpu.memory_space<vmem>>, vector<8x128xbf16>
      tpu.vector_store %arg23[%c0_79, %c0_80], %161 {strides = array<i32>} : memref<8x128xbf16, #tpu.memory_space<vmem>>, vector<8x128xbf16>,
    } else {
    }
    %c8_i32 = arith.constant 8 : i32
    %3 = arith.muli %arg1, %c8_i32 : i32
    %4 = tpu.assume_multiple %3, 8 : i32
    %c0 = arith.constant 0 : index
    %5 = arith.index_cast %4 : i32 to index
    %c0_1 = arith.constant 0 : index
    %6 = vector.load %arg2[%c0, %5, %c0_1] : memref<1x8x128xbf16, #tpu.memory_space<vmem>>, vector<1x8x128xbf16>
    %7 = vector.shape_cast %6 : vector<1x8x128xbf16> to vector<8x128xbf16>
    %8 = arith.extf %7 : vector<8x128xbf16> to vector<8x128xf32>
    %c0_2 = arith.constant 0 : index
    %c0_3 = arith.constant 0 : index
    %9 = vector.load %arg5[%c0_2, %c0_3] : memref<128x128xbf16, #tpu.memory_space<vmem>>, vector<128x128xbf16>
    %cst = arith.constant dense<0.000000e+00> : vector<8x128xf32>
    %10 = tpu.matmul %7, %9, %cst {dimension_numbers = #tpu.dot_dimension_numbers<[1], [0], [0], [1], [0, 0, 1, 1], [], []>} : vector<8x128xbf16>, vector<128x128xbf16>, vector<8x128xf32> -> vector<8x128xf32>
    %c0_4 = arith.constant 0 : index
    %c0_5 = arith.constant 0 : index
    %11 = vector.load %arg6[%c0_4, %c0_5] : memref<1x128xf32, #tpu.memory_space<vmem>>, vector<1x128xf32>
    %12 = vector.broadcast %11 : vector<1x128xf32> to vector<8x128xf32>
    %13 = arith.addf %10, %12 : vector<8x128xf32>
    %14 = arith.truncf %13 : vector<8x128xf32> to vector<8x128xbf16>
    %c0_6 = arith.constant 0 : index
    %c0_7 = arith.constant 0 : index
    %15 = vector.load %arg22[%c0_6, %c0_7] : memref<8x128xbf16, #tpu.memory_space<vmem>>, vector<8x128xbf16>
    %c0_8 = arith.constant 0 : index
    %c0_9 = arith.constant 0 : index
    %16 = vector.load %arg23[%c0_8, %c0_9] : memref<8x128xbf16, #tpu.memory_space<vmem>>, vector<8x128xbf16>
    %c0_10 = arith.constant 0 : index
    %c0_11 = arith.constant 0 : index
    %c0_12 = arith.constant 0 : index
    %17 = vector.load %arg4[%c0_10, %c0_11, %c0_12] : memref<1x1x8xf32, #tpu.memory_space<vmem>>, vector<1x1x8xf32>
    %18 = vector.shape_cast %17 : vector<1x1x8xf32> to vector<1x8xf32>
    %19 = vector.extract_strided_slice %14 {offsets = [0, 0], sizes = [8, 16], strides = [1, 1]} : vector<8x128xbf16> to vector<8x16xbf16>
    %20 = vector.extract_strided_slice %15 {offsets = [0, 0], sizes = [8, 16], strides = [1, 1]} : vector<8x128xbf16> to vector<8x16xbf16>
    %21 = vector.extract_strided_slice %16 {offsets = [0, 0], sizes = [8, 16], strides = [1, 1]} : vector<8x128xbf16> to vector<8x16xbf16>
    %cst_13 = arith.constant dense<0.000000e+00> : vector<8x8xf32>
    %22 = tpu.matmul %19, %20, %cst_13 {dimension_numbers = #tpu.dot_dimension_numbers<[1], [1], [0], [0], [0, 0, 1, 0], [], []>} : vector<8x16xbf16>, vector<8x16xbf16>, vector<8x8xf32> -> vector<8x8xf32>
    %cst_14 = arith.constant 2.500000e-01 : f32
    %23 = vector.broadcast %cst_14 : f32 to vector<8x8xf32>
    %24 = arith.mulf %22, %23 : vector<8x8xf32>
    %25 = vector.broadcast %18 : vector<1x8xf32> to vector<8x8xf32>
    %26 = arith.addf %24, %25 : vector<8x8xf32>
    %cst_15 = arith.constant dense<0xFF800000> : vector<8xf32>
    %27 = vector.multi_reduction <maximumf>, %26, %cst_15 [1] : vector<8x8xf32> to vector<8xf32>
    %28 = vector.shape_cast %27 : vector<8xf32> to vector<8x1xf32>
    %29 = vector.broadcast %28 : vector<8x1xf32> to vector<8x8xf32>
    %30 = arith.subf %26, %29 : vector<8x8xf32>
    %31 = math.exp %30 : vector<8x8xf32>
    %cst_16 = arith.constant dense<0.000000e+00> : vector<8xf32>
    %32 = vector.multi_reduction <add>, %31, %cst_16 [1] : vector<8x8xf32> to vector<8xf32>
    %33 = vector.shape_cast %32 : vector<8xf32> to vector<8x1xf32>
    %34 = tpu.reciprocal %33 {approx = true} : vector<8x1xf32> -> vector<8x1xf32>
    %35 = vector.broadcast %34 : vector<8x1xf32> to vector<8x8xf32>
    %36 = arith.mulf %31, %35 : vector<8x8xf32>
    %37 = arith.truncf %36 : vector<8x8xf32> to vector<8x8xbf16>
    %cst_17 = arith.constant dense<0.000000e+00> : vector<8x16xf32>
    %38 = tpu.matmul %37, %21, %cst_17 {dimension_numbers = #tpu.dot_dimension_numbers<[1], [0], [0], [1], [0, 0, 1, 1], [], []>} : vector<8x8xbf16>, vector<8x16xbf16>, vector<8x16xf32> -> vector<8x16xf32>
    %39 = arith.truncf %38 : vector<8x16xf32> to vector<8x16xbf16>
    %40 = vector.extract_strided_slice %14 {offsets = [0, 16], sizes = [8, 16], strides = [1, 1]} : vector<8x128xbf16> to vector<8x16xbf16>
    %41 = vector.extract_strided_slice %15 {offsets = [0, 16], sizes = [8, 16], strides = [1, 1]} : vector<8x128xbf16> to vector<8x16xbf16>
    %42 = vector.extract_strided_slice %16 {offsets = [0, 16], sizes = [8, 16], strides = [1, 1]} : vector<8x128xbf16> to vector<8x16xbf16>
    %cst_18 = arith.constant dense<0.000000e+00> : vector<8x8xf32>
    %43 = tpu.matmul %40, %41, %cst_18 {dimension_numbers = #tpu.dot_dimension_numbers<[1], [1], [0], [0], [0, 0, 1, 0], [], []>} : vector<8x16xbf16>, vector<8x16xbf16>, vector<8x8xf32> -> vector<8x8xf32>
    %cst_19 = arith.constant 2.500000e-01 : f32
    %44 = vector.broadcast %cst_19 : f32 to vector<8x8xf32>
    %45 = arith.mulf %43, %44 : vector<8x8xf32>
    %46 = vector.broadcast %18 : vector<1x8xf32> to vector<8x8xf32>
    %47 = arith.addf %45, %46 : vector<8x8xf32>
    %cst_20 = arith.constant dense<0xFF800000> : vector<8xf32>
    %48 = vector.multi_reduction <maximumf>, %47, %cst_20 [1] : vector<8x8xf32> to vector<8xf32>
    %49 = vector.shape_cast %48 : vector<8xf32> to vector<8x1xf32>
    %50 = vector.broadcast %49 : vector<8x1xf32> to vector<8x8xf32>
    %51 = arith.subf %47, %50 : vector<8x8xf32>
    %52 = math.exp %51 : vector<8x8xf32>
    %cst_21 = arith.constant dense<0.000000e+00> : vector<8xf32>
    %53 = vector.multi_reduction <add>, %52, %cst_21 [1] : vector<8x8xf32> to vector<8xf32>
    %54 = vector.shape_cast %53 : vector<8xf32> to vector<8x1xf32>
    %55 = tpu.reciprocal %54 {approx = true} : vector<8x1xf32> -> vector<8x1xf32>
    %56 = vector.broadcast %55 : vector<8x1xf32> to vector<8x8xf32>
    %57 = arith.mulf %52, %56 : vector<8x8xf32>
    %58 = arith.truncf %57 : vector<8x8xf32> to vector<8x8xbf16>
    %cst_22 = arith.constant dense<0.000000e+00> : vector<8x16xf32>
    %59 = tpu.matmul %58, %42, %cst_22 {dimension_numbers = #tpu.dot_dimension_numbers<[1], [0], [0], [1], [0, 0, 1, 1], [], []>} : vector<8x8xbf16>, vector<8x16xbf16>, vector<8x16xf32> -> vector<8x16xf32>
    %60 = arith.truncf %59 : vector<8x16xf32> to vector<8x16xbf16>
    %cst_23 = arith.constant 0.000000e+00 : bf16
    %61 = vector.broadcast %cst_23 : bf16 to vector<8x96xbf16>
    %62 = tpu.concatenate %39, %60, %61 in 1 : vector<8x16xbf16>, vector<8x16xbf16>, vector<8x96xbf16> -> vector<8x128xbf16>
    %c0_24 = arith.constant 0 : index
    %c0_25 = arith.constant 0 : index
    %63 = vector.load %arg11[%c0_24, %c0_25] : memref<128x128xbf16, #tpu.memory_space<vmem>>, vector<128x128xbf16>
    %cst_26 = arith.constant dense<0.000000e+00> : vector<8x128xf32>
    %64 = tpu.matmul %62, %63, %cst_26 {dimension_numbers = #tpu.dot_dimension_numbers<[1], [0], [0], [1], [0, 0, 1, 1], [], []>} : vector<8x128xbf16>, vector<128x128xbf16>, vector<8x128xf32> -> vector<8x128xf32>
    %c0_27 = arith.constant 0 : index
    %c0_28 = arith.constant 0 : index
    %65 = vector.load %arg12[%c0_27, %c0_28] : memref<1x128xf32, #tpu.memory_space<vmem>>, vector<1x128xf32>
    %66 = vector.broadcast %65 : vector<1x128xf32> to vector<8x128xf32>
    %67 = arith.addf %64, %66 : vector<8x128xf32>
    %68 = tpu.iota {dimensions = array<i32: 1>} : vector<1x128xi32>
    %c32_i32 = arith.constant 32 : i32
    %69 = vector.broadcast %c32_i32 : i32 to vector<1x128xi32>
    %70 = arith.cmpi slt, %68, %69 : vector<1x128xi32>
    %71 = arith.extui %70 : vector<1x128xi1> to vector<1x128xi32>
    %72 = arith.sitofp %71 : vector<1x128xi32> to vector<1x128xf32>
    %c0_29 = arith.constant 0 : index
    %c0_30 = arith.constant 0 : index
    %c0_31 = arith.constant 0 : index
    %73 = vector.load %arg3[%c0_29, %c0_30, %c0_31] : memref<1x8x1xf32, #tpu.memory_space<vmem>>, vector<1x8x1xf32>
    %74 = vector.shape_cast %73 : vector<1x8x1xf32> to vector<8x1xf32>
    %75 = arith.addf %67, %8 : vector<8x128xf32>
    %c0_32 = arith.constant 0 : index
    %c0_33 = arith.constant 0 : index
    %76 = vector.load %arg13[%c0_32, %c0_33] : memref<1x128xf32, #tpu.memory_space<vmem>>, vector<1x128xf32>
    %c0_34 = arith.constant 0 : index
    %c0_35 = arith.constant 0 : index
    %77 = vector.load %arg14[%c0_34, %c0_35] : memref<1x128xf32, #tpu.memory_space<vmem>>, vector<1x128xf32>
    %cst_36 = arith.constant dense<0.000000e+00> : vector<8xf32>
    %78 = vector.multi_reduction <add>, %75, %cst_36 [1] : vector<8x128xf32> to vector<8xf32>
    %79 = vector.shape_cast %78 : vector<8xf32> to vector<8x1xf32>
    %cst_37 = arith.constant 3.125000e-02 : f32
    %80 = vector.broadcast %cst_37 : f32 to vector<8x1xf32>
    %81 = arith.mulf %79, %80 : vector<8x1xf32>
    %82 = vector.broadcast %81 : vector<8x1xf32> to vector<8x128xf32>
    %83 = arith.subf %75, %82 : vector<8x128xf32>
    %84 = vector.broadcast %72 : vector<1x128xf32> to vector<8x128xf32>
    %85 = arith.mulf %83, %84 : vector<8x128xf32>
    %86 = arith.mulf %85, %85 : vector<8x128xf32>
    %cst_38 = arith.constant dense<0.000000e+00> : vector<8xf32>
    %87 = vector.multi_reduction <add>, %86, %cst_38 [1] : vector<8x128xf32> to vector<8xf32>
    %88 = vector.shape_cast %87 : vector<8xf32> to vector<8x1xf32>
    %cst_39 = arith.constant 3.125000e-02 : f32
    %89 = vector.broadcast %cst_39 : f32 to vector<8x1xf32>
    %90 = arith.mulf %88, %89 : vector<8x1xf32>
    %cst_40 = arith.constant 9.99999974E-6 : f32
    %91 = vector.broadcast %cst_40 : f32 to vector<8x1xf32>
    %92 = arith.addf %90, %91 : vector<8x1xf32>
    %93 = math.rsqrt %92 : vector<8x1xf32>
    %94 = vector.broadcast %93 : vector<8x1xf32> to vector<8x128xf32>
    %95 = arith.mulf %85, %94 : vector<8x128xf32>
    %96 = vector.broadcast %76 : vector<1x128xf32> to vector<8x128xf32>
    %97 = arith.mulf %95, %96 : vector<8x128xf32>
    %98 = vector.broadcast %77 : vector<1x128xf32> to vector<8x128xf32>
    %99 = arith.addf %97, %98 : vector<8x128xf32>
    %100 = vector.broadcast %74 : vector<8x1xf32> to vector<8x128xf32>
    %101 = arith.mulf %99, %100 : vector<8x128xf32>
    %102 = arith.truncf %101 : vector<8x128xf32> to vector<8x128xbf16>
    %c0_41 = arith.constant 0 : index
    %c0_42 = arith.constant 0 : index
    %103 = vector.load %arg15[%c0_41, %c0_42] : memref<128x128xbf16, #tpu.memory_space<vmem>>, vector<128x128xbf16>
    %cst_43 = arith.constant dense<0.000000e+00> : vector<8x128xf32>
    %104 = tpu.matmul %102, %103, %cst_43 {dimension_numbers = #tpu.dot_dimension_numbers<[1], [0], [0], [1], [0, 0, 1, 1], [], []>} : vector<8x128xbf16>, vector<128x128xbf16>, vector<8x128xf32> -> vector<8x128xf32>
    %c0_44 = arith.constant 0 : index
    %c0_45 = arith.constant 0 : index
    %105 = vector.load %arg16[%c0_44, %c0_45] : memref<1x128xf32, #tpu.memory_space<vmem>>, vector<1x128xf32>
    %106 = vector.broadcast %105 : vector<1x128xf32> to vector<8x128xf32>
    %107 = arith.addf %104, %106 : vector<8x128xf32>
    %cst_46 = arith.constant 0.000000e+00 : f32
    %108 = vector.broadcast %cst_46 : f32 to vector<8x128xf32>
    %109 = arith.maximumf %107, %108 : vector<8x128xf32>
    %110 = arith.truncf %109 : vector<8x128xf32> to vector<8x128xbf16>
    %c0_47 = arith.constant 0 : index
    %c0_48 = arith.constant 0 : index
    %111 = vector.load %arg17[%c0_47, %c0_48] : memref<128x128xbf16, #tpu.memory_space<vmem>>, vector<128x128xbf16>
    %cst_49 = arith.constant dense<0.000000e+00> : vector<8x128xf32>
    %112 = tpu.matmul %110, %111, %cst_49 {dimension_numbers = #tpu.dot_dimension_numbers<[1], [0], [0], [1], [0, 0, 1, 1], [], []>} : vector<8x128xbf16>, vector<128x128xbf16>, vector<8x128xf32> -> vector<8x128xf32>
    %c0_50 = arith.constant 0 : index
    %c0_51 = arith.constant 0 : index
    %113 = vector.load %arg18[%c0_50, %c0_51] : memref<1x128xf32, #tpu.memory_space<vmem>>, vector<1x128xf32>
    %114 = vector.broadcast %113 : vector<1x128xf32> to vector<8x128xf32>
    %115 = arith.addf %112, %114 : vector<8x128xf32>
    %116 = arith.addf %115, %101 : vector<8x128xf32>
    %c0_52 = arith.constant 0 : index
    %c0_53 = arith.constant 0 : index
    %117 = vector.load %arg19[%c0_52, %c0_53] : memref<1x128xf32, #tpu.memory_space<vmem>>, vector<1x128xf32>
    %c0_54 = arith.constant 0 : index
    %c0_55 = arith.constant 0 : index
    %118 = vector.load %arg20[%c0_54, %c0_55] : memref<1x128xf32, #tpu.memory_space<vmem>>, vector<1x128xf32>
    %cst_56 = arith.constant dense<0.000000e+00> : vector<8xf32>
    %119 = vector.multi_reduction <add>, %116, %cst_56 [1] : vector<8x128xf32> to vector<8xf32>
    %120 = vector.shape_cast %119 : vector<8xf32> to vector<8x1xf32>
    %cst_57 = arith.constant 3.125000e-02 : f32
    %121 = vector.broadcast %cst_57 : f32 to vector<8x1xf32>
    %122 = arith.mulf %120, %121 : vector<8x1xf32>
    %123 = vector.broadcast %122 : vector<8x1xf32> to vector<8x128xf32>
    %124 = arith.subf %116, %123 : vector<8x128xf32>
    %125 = vector.broadcast %72 : vector<1x128xf32> to vector<8x128xf32>
    %126 = arith.mulf %124, %125 : vector<8x128xf32>
    %127 = arith.mulf %126, %126 : vector<8x128xf32>
    %cst_58 = arith.constant dense<0.000000e+00> : vector<8xf32>
    %128 = vector.multi_reduction <add>, %127, %cst_58 [1] : vector<8x128xf32> to vector<8xf32>
    %129 = vector.shape_cast %128 : vector<8xf32> to vector<8x1xf32>
    %cst_59 = arith.constant 3.125000e-02 : f32
    %130 = vector.broadcast %cst_59 : f32 to vector<8x1xf32>
    %131 = arith.mulf %129, %130 : vector<8x1xf32>
    %cst_60 = arith.constant 9.99999974E-6 : f32
    %132 = vector.broadcast %cst_60 : f32 to vector<8x1xf32>
    %133 = arith.addf %131, %132 : vector<8x1xf32>
    %134 = math.rsqrt %133 : vector<8x1xf32>
    %135 = vector.broadcast %134 : vector<8x1xf32> to vector<8x128xf32>
    %136 = arith.mulf %126, %135 : vector<8x128xf32>
    %137 = vector.broadcast %117 : vector<1x128xf32> to vector<8x128xf32>
    %138 = arith.mulf %136, %137 : vector<8x128xf32>
    %139 = vector.broadcast %118 : vector<1x128xf32> to vector<8x128xf32>
    %140 = arith.addf %138, %139 : vector<8x128xf32>
    %141 = vector.broadcast %74 : vector<8x1xf32> to vector<8x128xf32>
    %142 = arith.mulf %140, %141 : vector<8x128xf32>
    %143 = arith.truncf %142 : vector<8x128xf32> to vector<8x128xbf16>
    %c0_61 = arith.constant 0 : index
    %c0_62 = arith.constant 0 : index
    %c0_63 = arith.constant 0 : index
    %144 = vector.load %arg21[%c0_61, %c0_62, %c0_63] : memref<1x8x128xbf16, #tpu.memory_space<vmem>>, vector<1x8x128xbf16>
    %145 = vector.shape_cast %144 : vector<1x8x128xbf16> to vector<8x128xbf16>
    %146 = vector.shape_cast %143 : vector<8x128xbf16> to vector<1x8x128xbf16>
    tpu.vector_store %arg21[%c0_61, %c0_62, %c0_63], %146 {strides = array<i32>} : memref<1x8x128xbf16, #tpu.memory_space<vmem>>, vector<1x8x128xbf16>,
    return
  }
  func.func @transform_0(%arg0: i32, %arg1: i32) -> (i32, i32, i32) {
    %c0_i32 = arith.constant 0 : i32
    %c0_i32_0 = arith.constant 0 : i32
    %c0_i32_1 = arith.constant 0 : i32
    return %arg0, %c0_i32, %c0_i32_0 : i32, i32, i32
  }
  func.func @transform_1(%arg0: i32, %arg1: i32) -> (i32, i32, i32) {
    %c0_i32 = arith.constant 0 : i32
    %c0_i32_0 = arith.constant 0 : i32
    return %arg0, %arg1, %c0_i32 : i32, i32, i32
  }
  func.func @transform_2(%arg0: i32, %arg1: i32) -> (i32, i32, i32) {
    %c0_i32 = arith.constant 0 : i32
    %c0_i32_0 = arith.constant 0 : i32
    %c0_i32_1 = arith.constant 0 : i32
    return %arg0, %c0_i32, %c0_i32_0 : i32, i32, i32
  }
  func.func @transform_3(%arg0: i32, %arg1: i32) -> (i32, i32) {
    %c0_i32 = arith.constant 0 : i32
    %c0_i32_0 = arith.constant 0 : i32
    %c0_i32_1 = arith.constant 0 : i32
    return %c0_i32, %c0_i32_0 : i32, i32
  }
  func.func @transform_4(%arg0: i32, %arg1: i32) -> (i32, i32) {
    %c0_i32 = arith.constant 0 : i32
    %c0_i32_0 = arith.constant 0 : i32
    %c0_i32_1 = arith.constant 0 : i32
    return %c0_i32, %c0_i32_0 : i32, i32
  }
  func.func @transform_5(%arg0: i32, %arg1: i32) -> (i32, i32) {
    %c0_i32 = arith.constant 0 : i32
    %c0_i32_0 = arith.constant 0 : i32
    %c0_i32_1 = arith.constant 0 : i32
    return %c0_i32, %c0_i32_0 : i32, i32
  }
  func.func @transform_6(%arg0: i32, %arg1: i32) -> (i32, i32) {
    %c0_i32 = arith.constant 0 : i32
    %c0_i32_0 = arith.constant 0 : i32
    %c0_i32_1 = arith.constant 0 : i32
    return %c0_i32, %c0_i32_0 : i32, i32
  }
  func.func @transform_7(%arg0: i32, %arg1: i32) -> (i32, i32) {
    %c0_i32 = arith.constant 0 : i32
    %c0_i32_0 = arith.constant 0 : i32
    %c0_i32_1 = arith.constant 0 : i32
    return %c0_i32, %c0_i32_0 : i32, i32
  }
  func.func @transform_8(%arg0: i32, %arg1: i32) -> (i32, i32) {
    %c0_i32 = arith.constant 0 : i32
    %c0_i32_0 = arith.constant 0 : i32
    %c0_i32_1 = arith.constant 0 : i32
    return %c0_i32, %c0_i32_0 : i32, i32
  }
  func.func @transform_9(%arg0: i32, %arg1: i32) -> (i32, i32) {
    %c0_i32 = arith.constant 0 : i32
    %c0_i32_0 = arith.constant 0 : i32
    %c0_i32_1 = arith.constant 0 : i32
    return %c0_i32, %c0_i32_0 : i32, i32
  }
  func.func @transform_10(%arg0: i32, %arg1: i32) -> (i32, i32) {
    %c0_i32 = arith.constant 0 : i32
    %c0_i32_0 = arith.constant 0 : i32
    %c0_i32_1 = arith.constant 0 : i32
    return %c0_i32, %c0_i32_0 : i32, i32
  }
  func.func @transform_11(%arg0: i32, %arg1: i32) -> (i32, i32) {
    %c0_i32 = arith.constant 0 : i32
    %c0_i32_0 = arith.constant 0 : i32
    %c0_i32_1 = arith.constant 0 : i32
    return %c0_i32, %c0_i32_0 : i32, i32
  }
  func.func @transform_12(%arg0: i32, %arg1: i32) -> (i32, i32) {
    %c0_i32 = arith.constant 0 : i32
    %c0_i32_0 = arith.constant 0 : i32
    %c0_i32_1 = arith.constant 0 : i32
    return %c0_i32, %c0_i32_0 : i32, i32
  }
  func.func @transform_13(%arg0: i32, %arg1: i32) -> (i32, i32) {
    %c0_i32 = arith.constant 0 : i32
    %c0_i32_0 = arith.constant 0 : i32
    %c0_i32_1 = arith.constant 0 : i32
    return %c0_i32, %c0_i32_0 : i32, i32
  }
  func.func @transform_14(%arg0: i32, %arg1: i32) -> (i32, i32) {
    %c0_i32 = arith.constant 0 : i32
    %c0_i32_0 = arith.constant 0 : i32
    %c0_i32_1 = arith.constant 0 : i32
    return %c0_i32, %c0_i32_0 : i32, i32
  }
  func.func @transform_15(%arg0: i32, %arg1: i32) -> (i32, i32) {
    %c0_i32 = arith.constant 0 : i32
    %c0_i32_0 = arith.constant 0 : i32
    %c0_i32_1 = arith.constant 0 : i32
    return %c0_i32, %c0_i32_0 : i32, i32
  }
  func.func @transform_16(%arg0: i32, %arg1: i32) -> (i32, i32) {
    %c0_i32 = arith.constant 0 : i32
    %c0_i32_0 = arith.constant 0 : i32
    %c0_i32_1 = arith.constant 0 : i32
    return %c0_i32, %c0_i32_0 : i32, i32
  }
  func.func @transform_17(%arg0: i32, %arg1: i32) -> (i32, i32) {
    %c0_i32 = arith.constant 0 : i32
    %c0_i32_0 = arith.constant 0 : i32
    %c0_i32_1 = arith.constant 0 : i32
    return %c0_i32, %c0_i32_0 : i32, i32
  }
  func.func @transform_18(%arg0: i32, %arg1: i32) -> (i32, i32) {
    %c0_i32 = arith.constant 0 : i32
    %c0_i32_0 = arith.constant 0 : i32
    %c0_i32_1 = arith.constant 0 : i32
    return %c0_i32, %c0_i32_0 : i32, i32
  }
  func.func @transform_19(%arg0: i32, %arg1: i32) -> (i32, i32, i32) {
    %c0_i32 = arith.constant 0 : i32
    %c0_i32_0 = arith.constant 0 : i32
    return %arg0, %arg1, %c0_i32 : i32, i32, i32
  }
}

</mosaic_0001>

<llo_original>
// kernel: tpu_custom_call.1
$region0: #{tpu_custom_call.1}
  #allocation0 [shape = 'u32[]', space=smem, size = 0x4, offset = 0x4, fixed_abs, tag = 'smem constant byte address 0x4 - core index']
  #allocation1 [shape = 'u32[144,128]{1,0:T(1,128)}', space=vmem, size = 0x12000, scoped, tag = 'internal scratch']
  #allocation2 [shape = 'bf16[8,128]{1,0:T(8,128)(2,1)}', space=vmem, size = 0x800, scoped, tag = 'scratch operand']
  #allocation3 [shape = 'bf16[8,128]{1,0:T(8,128)(2,1)}', space=vmem, size = 0x800, scoped, tag = 'scratch operand']
  %s0 = inlined_call_operand.vmem [shape: bf16[2,8,128], index: 0, kind: input, shape index: {}]
  %s1 = inlined_call_operand.vmem [shape: f32[2,8,1], index: 1, kind: input, shape index: {}]
  %s2 = inlined_call_operand.vmem [shape: f32[2,1,8], index: 2, kind: input, shape index: {}]
  %s3 = inlined_call_operand.hbm [shape: bf16[128,128], index: 3, kind: input, shape index: {}]
  %s4 = inlined_call_operand.vmem [shape: f32[1,128], index: 4, kind: input, shape index: {}]
  %s5 = inlined_call_operand.hbm [shape: bf16[128,128], index: 5, kind: input, shape index: {}]
  %s6 = inlined_call_operand.vmem [shape: f32[1,128], index: 6, kind: input, shape index: {}]
  %s7 = inlined_call_operand.hbm [shape: bf16[128,128], index: 7, kind: input, shape index: {}]
  %s8 = inlined_call_operand.vmem [shape: f32[1,128], index: 8, kind: input, shape index: {}]
  %s9 = inlined_call_operand.hbm [shape: bf16[128,128], index: 9, kind: input, shape index: {}]
  %s10 = inlined_call_operand.vmem [shape: f32[1,128], index: 10, kind: input, shape index: {}]
  %s11 = inlined_call_operand.vmem [shape: f32[1,128], index: 11, kind: input, shape index: {}]
  %s12 = inlined_call_operand.vmem [shape: f32[1,128], index: 12, kind: input, shape index: {}]
  %s13 = inlined_call_operand.hbm [shape: bf16[128,128], index: 13, kind: input, shape index: {}]
  %s14 = inlined_call_operand.vmem [shape: f32[1,128], index: 14, kind: input, shape index: {}]
  %s15 = inlined_call_operand.hbm [shape: bf16[128,128], index: 15, kind: input, shape index: {}]
  %s16 = inlined_call_operand.vmem [shape: f32[1,128], index: 16, kind: input, shape index: {}]
  %s17 = inlined_call_operand.vmem [shape: f32[1,128], index: 17, kind: input, shape index: {}]
  %s18 = inlined_call_operand.vmem [shape: f32[1,128], index: 18, kind: input, shape index: {}]
  %s19 = inlined_call_operand.hbm [shape: bf16[2,8,128], index: 19, kind: output, shape index: {}]
  %s20 = sld [smem:[#allocation0]]
  $region137: #{tpu_custom_call.1} parent=0
    _
  %s22 = ssub.s32 1, %s20
  %s23 = scalar_select 0, %s22, %s20
  $region1: #{tpu_custom_call.1} parent=0
    #allocation4 [shape = 'u8[32768]{0}', space=vmem, size = 0x8000, scoped, tag = 'input window, operand 3, single buffered']
    #allocation5 [shape = 's32[2]{0}', space=sflag, size = 0x8, scoped, tag = 'scoped memory for tpu_custom_call.1']
    #allocation6 [shape = 's32[2]{0}', space=sflag, size = 0x8, scoped, tag = 'scoped memory for tpu_custom_call.1']
    #allocation7 [shape = 'u8[32768]{0}', space=vmem, size = 0x8000, scoped, tag = 'input window, operand 5, single buffered']
    #allocation8 [shape = 's32[1]{0}', space=sflag, size = 0x4, scoped, tag = 'scoped memory for tpu_custom_call.1']
    #allocation9 [shape = 'u8[32768]{0}', space=vmem, size = 0x8000, scoped, tag = 'input window, operand 7, single buffered']
    #allocation10 [shape = 'u8[32768]{0}', space=vmem, size = 0x8000, scoped, tag = 'input window, operand 9, single buffered']
    #allocation11 [shape = 's32[1]{0}', space=sflag, size = 0x4, scoped, tag = 'scoped memory for tpu_custom_call.1']
    #allocation12 [shape = 'u8[32768]{0}', space=vmem, size = 0x8000, scoped, tag = 'input window, operand 13, single buffered']
    #allocation13 [shape = 'u8[32768]{0}', space=vmem, size = 0x8000, scoped, tag = 'input window, operand 15, single buffered']
    #allocation14 [shape = 's32[1]{0}', space=sflag, size = 0x4, scoped, tag = 'scoped memory for tpu_custom_call.1']
    #allocation15 [shape = 'u8[4096]{0}', space=vmem, size = 0x1000, scoped, tag = 'output window, operand 0']
    %24 = vsyncpa [#allocation5], 0
    %25 = vsyncpa [#allocation8], 0
    %26 = vsyncpa [#allocation11], 0
    %27 = vsyncpa [#allocation14], 0
    %28 = vsyncpa [#allocation6], 0
    %s29 = scalar_lea.sflag [#allocation6], 1
    %30 = vsyncpa %s29, 0
    loop: start=0, step=1, limit=4
    $region2: #{tpu_custom_call.1} parent=1 // loop_pre_header
      _
    $region3: #{tpu_custom_call.1} parent=1 // loop_header
      %s32 = sphi 0, %s36
      %p33 = scmp.ge.s32.totalorder %s32, 4
      %s39 = sphi 0, %s51
      %s40 = sphi 0, %s47
      %s41 = sphi 0, %s39
      %s42 = sphi 0, %s40
      %s43 = sphi 0, %s41
      %s44 = sphi 0, %s42
      %s54 = sphi 0, %s56
      %s57 = sphi 0, %s54
      %s58 = sphi 0, %s57
      %s74 = sphi 0, %s58
      %s82 = sphi 0, %s84
      %s85 = sphi 0, %s82
      %s86 = sphi 0, %s85
      %s102 = sphi 0, %s86
      %s108 = sphi 0, %s110
      %s111 = sphi 0, %s108
      %s112 = sphi 0, %s111
      %s128 = sphi 0, %s112
      %s132 = sphi 0, %s132
      %s134 = sphi 0, %s132
      %s135 = sphi 0, %s134
      %s149 = sphi 0, %s135
      %s153 = sphi 0, %s153
      %s155 = sphi 0, %s153
      %s156 = sphi 0, %s155
      %s170 = sphi 0, %s156
      %s174 = sphi 0, %s174
      %s176 = sphi 0, %s174
      %s177 = sphi 0, %s176
      %s191 = sphi 0, %s177
      %s195 = sphi 0, %s195
      %s197 = sphi 0, %s195
      %s198 = sphi 0, %s197
      %s212 = sphi 0, %s198
      %s216 = sphi 0, %s216
      %s218 = sphi 0, %s216
      %s219 = sphi 0, %s218
      %s233 = sphi 0, %s219
      %s237 = sphi 0, %s237
      %s239 = sphi 0, %s237
      %s240 = sphi 0, %s239
      %s254 = sphi 0, %s240
      %s258 = sphi 0, %s258
      %s260 = sphi 0, %s258
      %s261 = sphi 0, %s260
      %s275 = sphi 0, %s261
      %s279 = sphi 0, %s279
      %s281 = sphi 0, %s279
      %s282 = sphi 0, %s281
      %s296 = sphi 0, %s282
      %s300 = sphi 0, %s300
      %s302 = sphi 0, %s300
      %s303 = sphi 0, %s302
      %s317 = sphi 0, %s303
      %s321 = sphi 0, %s321
      %s323 = sphi 0, %s321
      %s324 = sphi 0, %s323
      %s338 = sphi 0, %s324
      %s342 = sphi 0, %s342
      %s344 = sphi 0, %s342
      %s345 = sphi 0, %s344
      %s359 = sphi 0, %s345
      %s363 = sphi 0, %s363
      %s365 = sphi 0, %s363
      %s366 = sphi 0, %s365
      %s380 = sphi 0, %s366
      %s384 = sphi 0, %s384
      %s386 = sphi 0, %s384
      %s387 = sphi 0, %s386
      %s401 = sphi 0, %s387
      %s405 = sphi 0, %s405
      %s407 = sphi 0, %s405
      %s408 = sphi 0, %s407
      %s422 = sphi 0, %s408
      %s426 = sphi 0, %s426
      %s428 = sphi 0, %s426
      %s429 = sphi 0, %s428
      %s443 = sphi 0, %s429
      %s447 = sphi 0, %s447
      %s449 = sphi 0, %s447
      %s450 = sphi 0, %s449
      %s464 = sphi 0, %s450
      %s472 = sphi 0, %s474
      %s475 = sphi 0, %s472
      %s476 = sphi 0, %s475
      %s492 = sphi 0, %s476
    $region4: #{tpu_custom_call.1} parent=1 // loop_header_branch
      %35 = sbr.rel (%p33) target = $region8
    $region5: #{tpu_custom_call.1} parent=1 // loop_body
      %s37 = ssub.s32 %s32, 1
      %s38 = ssub.s32 %s32, 2
      %s45 = sadd.s32 1, %s40
      %p46 = scmp.ge.s32.totalorder %s45, 1
      %s47 = scalar_select %p46, 0, %s45
      %s48 = sadd.s32 1, %s39
      %s49 = scalar_select %p46, %s48, %s39
      %p50 = scmp.ge.s32.totalorder %s49, 2
      %s51 = scalar_select %p50, 0, %s49
      %s52 = ssub.s32 %s39, %s51
      %p53 = scmp.eq.s32.totalorder %s52, 0
      %s55 = sadd.s32 %s54, 1
      %s56 = scalar_select %p53, %s54, %s55
      %p59 = pneg %p53
      %p60 = scmp.eq.s32.totalorder %s32, 1
      %p61 = por %p59, %p60
      %p62 = scmp.ne.s32.totalorder %s54, %s57
      %p63 = scmp.eq.s32.totalorder %s32, 0
      %p64 = por %p62, %p63
      %p65 = scmp.ne.s32.totalorder %s54, %s57
      %p66 = scmp.eq.s32.totalorder %s37, 1
      %p67 = por %p65, %p66
      %p68 = scmp.ne.s32.totalorder %s57, %s58
      %p69 = scmp.eq.s32.totalorder %s37, 0
      %p70 = por %p68, %p69
      %p71 = scmp.ne.s32.totalorder %s57, %s58
      %p72 = scmp.eq.s32.totalorder %s38, 1
      %p73 = por %p71, %p72
      %p75 = scmp.ne.s32.totalorder %s58, %s74
      %p76 = scmp.eq.s32.totalorder %s38, 0
      %p77 = por %p75, %p76
      %s78 = ssub.s32 %s39, %s51
      %s79 = ssub.s32 %s40, %s47
      %s80 = sor.u32 %s78, %s79
      %p81 = scmp.eq.s32.totalorder %s80, 0
      %s83 = sadd.s32 %s82, 1
      %s84 = scalar_select %p81, %s82, %s83
      %p87 = pneg %p81
      %p88 = scmp.eq.s32.totalorder %s32, 1
      %p89 = por %p87, %p88
      %p90 = scmp.ne.s32.totalorder %s82, %s85
      %p91 = scmp.eq.s32.totalorder %s32, 0
      %p92 = por %p90, %p91
      %p93 = scmp.ne.s32.totalorder %s82, %s85
      %p94 = scmp.eq.s32.totalorder %s37, 1
      %p95 = por %p93, %p94
      %p96 = scmp.ne.s32.totalorder %s85, %s86
      %p97 = scmp.eq.s32.totalorder %s37, 0
      %p98 = por %p96, %p97
      %p99 = scmp.ne.s32.totalorder %s85, %s86
      %p100 = scmp.eq.s32.totalorder %s38, 1
      %p101 = por %p99, %p100
      %p103 = scmp.ne.s32.totalorder %s86, %s102
      %p104 = scmp.eq.s32.totalorder %s38, 0
      %p105 = por %p103, %p104
      %s106 = ssub.s32 %s39, %s51
      %p107 = scmp.eq.s32.totalorder %s106, 0
      %s109 = sadd.s32 %s108, 1
      %s110 = scalar_select %p107, %s108, %s109
      %p113 = pneg %p107
      %p114 = scmp.eq.s32.totalorder %s32, 1
      %p115 = por %p113, %p114
      %p116 = scmp.ne.s32.totalorder %s108, %s111
      %p117 = scmp.eq.s32.totalorder %s32, 0
      %p118 = por %p116, %p117
      %p119 = scmp.ne.s32.totalorder %s108, %s111
      %p120 = scmp.eq.s32.totalorder %s37, 1
      %p121 = por %p119, %p120
      %p122 = scmp.ne.s32.totalorder %s111, %s112
      %p123 = scmp.eq.s32.totalorder %s37, 0
      %p124 = por %p122, %p123
      %p125 = scmp.ne.s32.totalorder %s111, %s112
      %p126 = scmp.eq.s32.totalorder %s38, 1
      %p127 = por %p125, %p126
      %p129 = scmp.ne.s32.totalorder %s112, %s128
      %p130 = scmp.eq.s32.totalorder %s38, 0
      %p131 = por %p129, %p130
      %s133 = sadd.s32 %s132, 1
      %p136 = scmp.eq.s32.totalorder %s32, 1
      %p137 = scmp.ne.s32.totalorder %s132, %s134
      %p138 = scmp.eq.s32.totalorder %s32, 0
      %p139 = por %p137, %p138
      %p140 = scmp.ne.s32.totalorder %s132, %s134
      %p141 = scmp.eq.s32.totalorder %s37, 1
      %p142 = por %p140, %p141
      %p143 = scmp.ne.s32.totalorder %s134, %s135
      %p144 = scmp.eq.s32.totalorder %s37, 0
      %p145 = por %p143, %p144
      %p146 = scmp.ne.s32.totalorder %s134, %s135
      %p147 = scmp.eq.s32.totalorder %s38, 1
      %p148 = por %p146, %p147
      %p150 = scmp.ne.s32.totalorder %s135, %s149
      %p151 = scmp.eq.s32.totalorder %s38, 0
      %p152 = por %p150, %p151
      %s154 = sadd.s32 %s153, 1
      %p157 = scmp.eq.s32.totalorder %s32, 1
      %p158 = scmp.ne.s32.totalorder %s153, %s155
      %p159 = scmp.eq.s32.totalorder %s32, 0
      %p160 = por %p158, %p159
      %p161 = scmp.ne.s32.totalorder %s153, %s155
      %p162 = scmp.eq.s32.totalorder %s37, 1
      %p163 = por %p161, %p162
      %p164 = scmp.ne.s32.totalorder %s155, %s156
      %p165 = scmp.eq.s32.totalorder %s37, 0
      %p166 = por %p164, %p165
      %p167 = scmp.ne.s32.totalorder %s155, %s156
      %p168 = scmp.eq.s32.totalorder %s38, 1
      %p169 = por %p167, %p168
      %p171 = scmp.ne.s32.totalorder %s156, %s170
      %p172 = scmp.eq.s32.totalorder %s38, 0
      %p173 = por %p171, %p172
      %s175 = sadd.s32 %s174, 1
      %p178 = scmp.eq.s32.totalorder %s32, 1
      %p179 = scmp.ne.s32.totalorder %s174, %s176
      %p180 = scmp.eq.s32.totalorder %s32, 0
      %p181 = por %p179, %p180
      %p182 = scmp.ne.s32.totalorder %s174, %s176
      %p183 = scmp.eq.s32.totalorder %s37, 1
      %p184 = por %p182, %p183
      %p185 = scmp.ne.s32.totalorder %s176, %s177
      %p186 = scmp.eq.s32.totalorder %s37, 0
      %p187 = por %p185, %p186
      %p188 = scmp.ne.s32.totalorder %s176, %s177
      %p189 = scmp.eq.s32.totalorder %s38, 1
      %p190 = por %p188, %p189
      %p192 = scmp.ne.s32.totalorder %s177, %s191
      %p193 = scmp.eq.s32.totalorder %s38, 0
      %p194 = por %p192, %p193
      %s196 = sadd.s32 %s195, 1
      %p199 = scmp.eq.s32.totalorder %s32, 1
      %p200 = scmp.ne.s32.totalorder %s195, %s197
      %p201 = scmp.eq.s32.totalorder %s32, 0
      %p202 = por %p200, %p201
      %p203 = scmp.ne.s32.totalorder %s195, %s197
      %p204 = scmp.eq.s32.totalorder %s37, 1
      %p205 = por %p203, %p204
      %p206 = scmp.ne.s32.totalorder %s197, %s198
      %p207 = scmp.eq.s32.totalorder %s37, 0
      %p208 = por %p206, %p207
      %p209 = scmp.ne.s32.totalorder %s197, %s198
      %p210 = scmp.eq.s32.totalorder %s38, 1
      %p211 = por %p209, %p210
      %p213 = scmp.ne.s32.totalorder %s198, %s212
      %p214 = scmp.eq.s32.totalorder %s38, 0
      %p215 = por %p213, %p214
      %s217 = sadd.s32 %s216, 1
      %p220 = scmp.eq.s32.totalorder %s32, 1
      %p221 = scmp.ne.s32.totalorder %s216, %s218
      %p222 = scmp.eq.s32.totalorder %s32, 0
      %p223 = por %p221, %p222
      %p224 = scmp.ne.s32.totalorder %s216, %s218
      %p225 = scmp.eq.s32.totalorder %s37, 1
      %p226 = por %p224, %p225
      %p227 = scmp.ne.s32.totalorder %s218, %s219
      %p228 = scmp.eq.s32.totalorder %s37, 0
      %p229 = por %p227, %p228
      %p230 = scmp.ne.s32.totalorder %s218, %s219
      %p231 = scmp.eq.s32.totalorder %s38, 1
      %p232 = por %p230, %p231
      %p234 = scmp.ne.s32.totalorder %s219, %s233
      %p235 = scmp.eq.s32.totalorder %s38, 0
      %p236 = por %p234, %p235
      %s238 = sadd.s32 %s237, 1
      %p241 = scmp.eq.s32.totalorder %s32, 1
      %p242 = scmp.ne.s32.totalorder %s237, %s239
      %p243 = scmp.eq.s32.totalorder %s32, 0
      %p244 = por %p242, %p243
      %p245 = scmp.ne.s32.totalorder %s237, %s239
      %p246 = scmp.eq.s32.totalorder %s37, 1
      %p247 = por %p245, %p246
      %p248 = scmp.ne.s32.totalorder %s239, %s240
      %p249 = scmp.eq.s32.totalorder %s37, 0
      %p250 = por %p248, %p249
      %p251 = scmp.ne.s32.totalorder %s239, %s240
      %p252 = scmp.eq.s32.totalorder %s38, 1
      %p253 = por %p251, %p252
      %p255 = scmp.ne.s32.totalorder %s240, %s254
      %p256 = scmp.eq.s32.totalorder %s38, 0
      %p257 = por %p255, %p256
      %s259 = sadd.s32 %s258, 1
      %p262 = scmp.eq.s32.totalorder %s32, 1
      %p263 = scmp.ne.s32.totalorder %s258, %s260
      %p264 = scmp.eq.s32.totalorder %s32, 0
      %p265 = por %p263, %p264
      %p266 = scmp.ne.s32.totalorder %s258, %s260
      %p267 = scmp.eq.s32.totalorder %s37, 1
      %p268 = por %p266, %p267
      %p269 = scmp.ne.s32.totalorder %s260, %s261
      %p270 = scmp.eq.s32.totalorder %s37, 0
      %p271 = por %p269, %p270
      %p272 = scmp.ne.s32.totalorder %s260, %s261
      %p273 = scmp.eq.s32.totalorder %s38, 1
      %p274 = por %p272, %p273
      %p276 = scmp.ne.s32.totalorder %s261, %s275
      %p277 = scmp.eq.s32.totalorder %s38, 0
      %p278 = por %p276, %p277
      %s280 = sadd.s32 %s279, 1
      %p283 = scmp.eq.s32.totalorder %s32, 1
      %p284 = scmp.ne.s32.totalorder %s279, %s281
      %p285 = scmp.eq.s32.totalorder %s32, 0
      %p286 = por %p284, %p285
      %p287 = scmp.ne.s32.totalorder %s279, %s281
      %p288 = scmp.eq.s32.totalorder %s37, 1
      %p289 = por %p287, %p288
      %p290 = scmp.ne.s32.totalorder %s281, %s282
      %p291 = scmp.eq.s32.totalorder %s37, 0
      %p292 = por %p290, %p291
      %p293 = scmp.ne.s32.totalorder %s281, %s282
      %p294 = scmp.eq.s32.totalorder %s38, 1
      %p295 = por %p293, %p294
      %p297 = scmp.ne.s32.totalorder %s282, %s296
      %p298 = scmp.eq.s32.totalorder %s38, 0
      %p299 = por %p297, %p298
      %s301 = sadd.s32 %s300, 1
      %p304 = scmp.eq.s32.totalorder %s32, 1
      %p305 = scmp.ne.s32.totalorder %s300, %s302
      %p306 = scmp.eq.s32.totalorder %s32, 0
      %p307 = por %p305, %p306
      %p308 = scmp.ne.s32.totalorder %s300, %s302
      %p309 = scmp.eq.s32.totalorder %s37, 1
      %p310 = por %p308, %p309
      %p311 = scmp.ne.s32.totalorder %s302, %s303
      %p312 = scmp.eq.s32.totalorder %s37, 0
      %p313 = por %p311, %p312
      %p314 = scmp.ne.s32.totalorder %s302, %s303
      %p315 = scmp.eq.s32.totalorder %s38, 1
      %p316 = por %p314, %p315
      %p318 = scmp.ne.s32.totalorder %s303, %s317
      %p319 = scmp.eq.s32.totalorder %s38, 0
      %p320 = por %p318, %p319
      %s322 = sadd.s32 %s321, 1
      %p325 = scmp.eq.s32.totalorder %s32, 1
      %p326 = scmp.ne.s32.totalorder %s321, %s323
      %p327 = scmp.eq.s32.totalorder %s32, 0
      %p328 = por %p326, %p327
      %p329 = scmp.ne.s32.totalorder %s321, %s323
      %p330 = scmp.eq.s32.totalorder %s37, 1
      %p331 = por %p329, %p330
      %p332 = scmp.ne.s32.totalorder %s323, %s324
      %p333 = scmp.eq.s32.totalorder %s37, 0
      %p334 = por %p332, %p333
      %p335 = scmp.ne.s32.totalorder %s323, %s324
      %p336 = scmp.eq.s32.totalorder %s38, 1
      %p337 = por %p335, %p336
      %p339 = scmp.ne.s32.totalorder %s324, %s338
      %p340 = scmp.eq.s32.totalorder %s38, 0
      %p341 = por %p339, %p340
      %s343 = sadd.s32 %s342, 1
      %p346 = scmp.eq.s32.totalorder %s32, 1
      %p347 = scmp.ne.s32.totalorder %s342, %s344
      %p348 = scmp.eq.s32.totalorder %s32, 0
      %p349 = por %p347, %p348
      %p350 = scmp.ne.s32.totalorder %s342, %s344
      %p351 = scmp.eq.s32.totalorder %s37, 1
      %p352 = por %p350, %p351
      %p353 = scmp.ne.s32.totalorder %s344, %s345
      %p354 = scmp.eq.s32.totalorder %s37, 0
      %p355 = por %p353, %p354
      %p356 = scmp.ne.s32.totalorder %s344, %s345
      %p357 = scmp.eq.s32.totalorder %s38, 1
      %p358 = por %p356, %p357
      %p360 = scmp.ne.s32.totalorder %s345, %s359
      %p361 = scmp.eq.s32.totalorder %s38, 0
      %p362 = por %p360, %p361
      %s364 = sadd.s32 %s363, 1
      %p367 = scmp.eq.s32.totalorder %s32, 1
      %p368 = scmp.ne.s32.totalorder %s363, %s365
      %p369 = scmp.eq.s32.totalorder %s32, 0
      %p370 = por %p368, %p369
      %p371 = scmp.ne.s32.totalorder %s363, %s365
      %p372 = scmp.eq.s32.totalorder %s37, 1
      %p373 = por %p371, %p372
      %p374 = scmp.ne.s32.totalorder %s365, %s366
      %p375 = scmp.eq.s32.totalorder %s37, 0
      %p376 = por %p374, %p375
      %p377 = scmp.ne.s32.totalorder %s365, %s366
      %p378 = scmp.eq.s32.totalorder %s38, 1
      %p379 = por %p377, %p378
      %p381 = scmp.ne.s32.totalorder %s366, %s380
      %p382 = scmp.eq.s32.totalorder %s38, 0
      %p383 = por %p381, %p382
      %s385 = sadd.s32 %s384, 1
      %p388 = scmp.eq.s32.totalorder %s32, 1
      %p389 = scmp.ne.s32.totalorder %s384, %s386
      %p390 = scmp.eq.s32.totalorder %s32, 0
      %p391 = por %p389, %p390
      %p392 = scmp.ne.s32.totalorder %s384, %s386
      %p393 = scmp.eq.s32.totalorder %s37, 1
      %p394 = por %p392, %p393
      %p395 = scmp.ne.s32.totalorder %s386, %s387
      %p396 = scmp.eq.s32.totalorder %s37, 0
      %p397 = por %p395, %p396
      %p398 = scmp.ne.s32.totalorder %s386, %s387
      %p399 = scmp.eq.s32.totalorder %s38, 1
      %p400 = por %p398, %p399
      %p402 = scmp.ne.s32.totalorder %s387, %s401
      %p403 = scmp.eq.s32.totalorder %s38, 0
      %p404 = por %p402, %p403
      %s406 = sadd.s32 %s405, 1
      %p409 = scmp.eq.s32.totalorder %s32, 1
      %p410 = scmp.ne.s32.totalorder %s405, %s407
      %p411 = scmp.eq.s32.totalorder %s32, 0
      %p412 = por %p410, %p411
      %p413 = scmp.ne.s32.totalorder %s405, %s407
      %p414 = scmp.eq.s32.totalorder %s37, 1
      %p415 = por %p413, %p414
      %p416 = scmp.ne.s32.totalorder %s407, %s408
      %p417 = scmp.eq.s32.totalorder %s37, 0
      %p418 = por %p416, %p417
      %p419 = scmp.ne.s32.totalorder %s407, %s408
      %p420 = scmp.eq.s32.totalorder %s38, 1
      %p421 = por %p419, %p420
      %p423 = scmp.ne.s32.totalorder %s408, %s422
      %p424 = scmp.eq.s32.totalorder %s38, 0
      %p425 = por %p423, %p424
      %s427 = sadd.s32 %s426, 1
      %p430 = scmp.eq.s32.totalorder %s32, 1
      %p431 = scmp.ne.s32.totalorder %s426, %s428
      %p432 = scmp.eq.s32.totalorder %s32, 0
      %p433 = por %p431, %p432
      %p434 = scmp.ne.s32.totalorder %s426, %s428
      %p435 = scmp.eq.s32.totalorder %s37, 1
      %p436 = por %p434, %p435
      %p437 = scmp.ne.s32.totalorder %s428, %s429
      %p438 = scmp.eq.s32.totalorder %s37, 0
      %p439 = por %p437, %p438
      %p440 = scmp.ne.s32.totalorder %s428, %s429
      %p441 = scmp.eq.s32.totalorder %s38, 1
      %p442 = por %p440, %p441
      %p444 = scmp.ne.s32.totalorder %s429, %s443
      %p445 = scmp.eq.s32.totalorder %s38, 0
      %p446 = por %p444, %p445
      %s448 = sadd.s32 %s447, 1
      %p451 = scmp.eq.s32.totalorder %s32, 1
      %p452 = scmp.ne.s32.totalorder %s447, %s449
      %p453 = scmp.eq.s32.totalorder %s32, 0
      %p454 = por %p452, %p453
      %p455 = scmp.ne.s32.totalorder %s447, %s449
      %p456 = scmp.eq.s32.totalorder %s37, 1
      %p457 = por %p455, %p456
      %p458 = scmp.ne.s32.totalorder %s449, %s450
      %p459 = scmp.eq.s32.totalorder %s37, 0
      %p460 = por %p458, %p459
      %p461 = scmp.ne.s32.totalorder %s449, %s450
      %p462 = scmp.eq.s32.totalorder %s38, 1
      %p463 = por %p461, %p462
      %p465 = scmp.ne.s32.totalorder %s450, %s464
      %p466 = scmp.eq.s32.totalorder %s38, 0
      %p467 = por %p465, %p466
      %s468 = ssub.s32 %s39, %s51
      %s469 = ssub.s32 %s40, %s47
      %s470 = sor.u32 %s468, %s469
      %p471 = scmp.eq.s32.totalorder %s470, 0
      %s473 = sadd.s32 %s472, 1
      %s474 = scalar_select %p471, %s472, %s473
      %p477 = pneg %p471
      %p478 = scmp.eq.s32.totalorder %s32, 1
      %p479 = por %p477, %p478
      %p480 = scmp.ne.s32.totalorder %s472, %s475
      %p481 = scmp.eq.s32.totalorder %s32, 0
      %p482 = por %p480, %p481
      %p483 = scmp.ne.s32.totalorder %s472, %s475
      %p484 = scmp.eq.s32.totalorder %s37, 1
      %p485 = por %p483, %p484
      %p486 = scmp.ne.s32.totalorder %s475, %s476
      %p487 = scmp.eq.s32.totalorder %s37, 0
      %p488 = por %p486, %p487
      %p489 = scmp.ne.s32.totalorder %s475, %s476
      %p490 = scmp.eq.s32.totalorder %s38, 1
      %p491 = por %p489, %p490
      %p493 = scmp.ne.s32.totalorder %s476, %s492
      %p494 = scmp.eq.s32.totalorder %s38, 0
      %p495 = por %p493, %p494
      %p496 = scmp.le.s32.totalorder 1, %s32
      %p497 = scmp.lt.s32.totalorder %s32, 3
      %p498 = pnand %p496, %p497
      %p499 = pneg %p498
      // Predicated region
      $region9: #{tpu_custom_call.1} parent=5 // pred_check
        _
      $region10: #{tpu_custom_call.1} parent=5 // pred_check_branch
        %501 = sbr.rel (%p498) target = $region12
      $region11: #{tpu_custom_call.1} parent=5 // pred_region
        %s502 = ssub.s32 %s32, 1
        // Predicated region
        $region13: #{tpu_custom_call.1} parent=11 // pred_check
          %p503 = pneg %p145
        $region14: #{tpu_custom_call.1} parent=11 // pred_check_branch
          %505 = sbr.rel (%p503) target = $region16
        $region15: #{tpu_custom_call.1} parent=11 // pred_region
          %s507 = ssub.s32 1024, 1024
          %508 = vsyncadd [#allocation5], %s507
          %s509 = sshll.u32 [#allocation4], 4
          %s510 = int_to_ptr.vmem [resolvable:$true] %s509
          %515 = dma.hbm_to_vmem [thread:$0]  %s3, 1024, %s510, [#allocation5], 64, 64, 4
        $region16: #{tpu_custom_call.1} parent=11 // pred_fallthru
          _
        // Predicated region
        $region17: #{tpu_custom_call.1} parent=11 // pred_check
          %p516 = pneg %p166
        $region18: #{tpu_custom_call.1} parent=11 // pred_check_branch
          %518 = sbr.rel (%p516) target = $region20
        $region19: #{tpu_custom_call.1} parent=11 // pred_region
          _
        $region20: #{tpu_custom_call.1} parent=11 // pred_fallthru
          _
        // Predicated region
        $region21: #{tpu_custom_call.1} parent=11 // pred_check
          %p519 = pneg %p187
        $region22: #{tpu_custom_call.1} parent=11 // pred_check_branch
          %521 = sbr.rel (%p519) target = $region24
        $region23: #{tpu_custom_call.1} parent=11 // pred_region
          %s523 = ssub.s32 1024, 1024
          %524 = vsyncadd [#allocation8], %s523
          %s525 = sshll.u32 [#allocation7], 4
          %s526 = int_to_ptr.vmem [resolvable:$true] %s525
          %531 = dma.hbm_to_vmem [thread:$0]  %s5, 1024, %s526, [#allocation8], 64, 64, 4
        $region24: #{tpu_custom_call.1} parent=11 // pred_fallthru
          _
        // Predicated region
        $region25: #{tpu_custom_call.1} parent=11 // pred_check
          %p532 = pneg %p208
        $region26: #{tpu_custom_call.1} parent=11 // pred_check_branch
          %534 = sbr.rel (%p532) target = $region28
        $region27: #{tpu_custom_call.1} parent=11 // pred_region
          _
        $region28: #{tpu_custom_call.1} parent=11 // pred_fallthru
          _
        // Predicated region
        $region29: #{tpu_custom_call.1} parent=11 // pred_check
          %p535 = pneg %p229
        $region30: #{tpu_custom_call.1} parent=11 // pred_check_branch
          %537 = sbr.rel (%p535) target = $region32
        $region31: #{tpu_custom_call.1} parent=11 // pred_region
          %s539 = ssub.s32 1024, 1024
          %540 = vsyncadd [#allocation8], %s539
          %s541 = sshll.u32 [#allocation9], 4
          %s542 = int_to_ptr.vmem [resolvable:$true] %s541
          %547 = dma.hbm_to_vmem [thread:$0]  %s7, 1024, %s542, [#allocation8], 64, 64, 4
        $region32: #{tpu_custom_call.1} parent=11 // pred_fallthru
          _
        // Predicated region
        $region33: #{tpu_custom_call.1} parent=11 // pred_check
          %p548 = pneg %p250
        $region34: #{tpu_custom_call.1} parent=11 // pred_check_branch
          %550 = sbr.rel (%p548) target = $region36
        $region35: #{tpu_custom_call.1} parent=11 // pred_region
          _
        $region36: #{tpu_custom_call.1} parent=11 // pred_fallthru
          _
        // Predicated region
        $region37: #{tpu_custom_call.1} parent=11 // pred_check
          %p551 = pneg %p271
        $region38: #{tpu_custom_call.1} parent=11 // pred_check_branch
          %553 = sbr.rel (%p551) target = $region40
        $region39: #{tpu_custom_call.1} parent=11 // pred_region
          %s555 = ssub.s32 1024, 1024
          %556 = vsyncadd [#allocation11], %s555
          %s557 = sshll.u32 [#allocation10], 4
          %s558 = int_to_ptr.vmem [resolvable:$true] %s557
          %563 = dma.hbm_to_vmem [thread:$0]  %s9, 1024, %s558, [#allocation11], 64, 64, 4
        $region40: #{tpu_custom_call.1} parent=11 // pred_fallthru
          _
        // Predicated region
        $region41: #{tpu_custom_call.1} parent=11 // pred_check
          %p564 = pneg %p292
        $region42: #{tpu_custom_call.1} parent=11 // pred_check_branch
          %566 = sbr.rel (%p564) target = $region44
        $region43: #{tpu_custom_call.1} parent=11 // pred_region
          _
        $region44: #{tpu_custom_call.1} parent=11 // pred_fallthru
          _
        // Predicated region
        $region45: #{tpu_custom_call.1} parent=11 // pred_check
          %p567 = pneg %p313
        $region46: #{tpu_custom_call.1} parent=11 // pred_check_branch
          %569 = sbr.rel (%p567) target = $region48
        $region47: #{tpu_custom_call.1} parent=11 // pred_region
          _
        $region48: #{tpu_custom_call.1} parent=11 // pred_fallthru
          _
        // Predicated region
        $region49: #{tpu_custom_call.1} parent=11 // pred_check
          %p570 = pneg %p334
        $region50: #{tpu_custom_call.1} parent=11 // pred_check_branch
          %572 = sbr.rel (%p570) target = $region52
        $region51: #{tpu_custom_call.1} parent=11 // pred_region
          _
        $region52: #{tpu_custom_call.1} parent=11 // pred_fallthru
          _
        // Predicated region
        $region53: #{tpu_custom_call.1} parent=11 // pred_check
          %p573 = pneg %p355
        $region54: #{tpu_custom_call.1} parent=11 // pred_check_branch
          %575 = sbr.rel (%p573) target = $region56
        $region55: #{tpu_custom_call.1} parent=11 // pred_region
          %s577 = ssub.s32 1024, 1024
          %578 = vsyncadd [#allocation11], %s577
          %s579 = sshll.u32 [#allocation12], 4
          %s580 = int_to_ptr.vmem [resolvable:$true] %s579
          %585 = dma.hbm_to_vmem [thread:$0]  %s13, 1024, %s580, [#allocation11], 64, 64, 4
        $region56: #{tpu_custom_call.1} parent=11 // pred_fallthru
          _
        // Predicated region
        $region57: #{tpu_custom_call.1} parent=11 // pred_check
          %p586 = pneg %p376
        $region58: #{tpu_custom_call.1} parent=11 // pred_check_branch
          %588 = sbr.rel (%p586) target = $region60
        $region59: #{tpu_custom_call.1} parent=11 // pred_region
          _
        $region60: #{tpu_custom_call.1} parent=11 // pred_fallthru
          _
        // Predicated region
        $region61: #{tpu_custom_call.1} parent=11 // pred_check
          %p589 = pneg %p397
        $region62: #{tpu_custom_call.1} parent=11 // pred_check_branch
          %591 = sbr.rel (%p589) target = $region64
        $region63: #{tpu_custom_call.1} parent=11 // pred_region
          %s593 = ssub.s32 1024, 1024
          %594 = vsyncadd [#allocation14], %s593
          %s595 = sshll.u32 [#allocation13], 4
          %s596 = int_to_ptr.vmem [resolvable:$true] %s595
          %601 = dma.hbm_to_vmem [thread:$0]  %s15, 1024, %s596, [#allocation14], 64, 64, 4
        $region64: #{tpu_custom_call.1} parent=11 // pred_fallthru
          _
        // Predicated region
        $region65: #{tpu_custom_call.1} parent=11 // pred_check
          %p602 = pneg %p418
        $region66: #{tpu_custom_call.1} parent=11 // pred_check_branch
          %604 = sbr.rel (%p602) target = $region68
        $region67: #{tpu_custom_call.1} parent=11 // pred_region
          _
        $region68: #{tpu_custom_call.1} parent=11 // pred_fallthru
          _
        // Predicated region
        $region69: #{tpu_custom_call.1} parent=11 // pred_check
          %p605 = pneg %p439
        $region70: #{tpu_custom_call.1} parent=11 // pred_check_branch
          %607 = sbr.rel (%p605) target = $region72
        $region71: #{tpu_custom_call.1} parent=11 // pred_region
          _
        $region72: #{tpu_custom_call.1} parent=11 // pred_fallthru
          _
        // Predicated region
        $region73: #{tpu_custom_call.1} parent=11 // pred_check
          %p608 = pneg %p460
        $region74: #{tpu_custom_call.1} parent=11 // pred_check_branch
          %610 = sbr.rel (%p608) target = $region76
        $region75: #{tpu_custom_call.1} parent=11 // pred_region
          _
        $region76: #{tpu_custom_call.1} parent=11 // pred_fallthru
          _
      $region12: #{tpu_custom_call.1} parent=5 // pred_fallthru
        _
      %p611 = scmp.lt.s32.totalorder %s32, 2
      // Predicated region
      $region77: #{tpu_custom_call.1} parent=5 // pred_check
        %p612 = pneg %p611
      $region78: #{tpu_custom_call.1} parent=5 // pred_check_branch
        %614 = sbr.rel (%p612) target = $region80
      $region79: #{tpu_custom_call.1} parent=5 // pred_region
        // Predicated region
        $region81: #{tpu_custom_call.1} parent=79 // pred_check
          %p615 = pneg %p64
        $region82: #{tpu_custom_call.1} parent=79 // pred_check_branch
          %617 = sbr.rel (%p615) target = $region84
        $region83: #{tpu_custom_call.1} parent=79 // pred_region
          %p618 = scmp.lt.s32.totalorder %s39, 1
          %s619 = scalar_select %p618, %s39, 1
          %s620 = smul.addr %s619, 4
          %s621 = scalar_lea.vmem %s0, %s620
        $region84: #{tpu_custom_call.1} parent=79 // pred_fallthru
          _
        // Predicated region
        $region85: #{tpu_custom_call.1} parent=79 // pred_check
          %p622 = pneg %p92
        $region86: #{tpu_custom_call.1} parent=79 // pred_check_branch
          %624 = sbr.rel (%p622) target = $region88
        $region87: #{tpu_custom_call.1} parent=79 // pred_region
          %p625 = scmp.lt.s32.totalorder %s39, 1
          %s626 = scalar_select %p625, %s39, 1
          %p627 = scmp.lt.s32.totalorder %s40, 0
          %s628 = scalar_select %p627, %s40, 0
          %s629 = sadd.s32 %s628, %s626
          %s630 = smul.addr %s629, 8
          %s631 = scalar_lea.vmem %s1, %s630
        $region88: #{tpu_custom_call.1} parent=79 // pred_fallthru
          _
        // Predicated region
        $region89: #{tpu_custom_call.1} parent=79 // pred_check
          %p632 = pneg %p118
        $region90: #{tpu_custom_call.1} parent=79 // pred_check_branch
          %634 = sbr.rel (%p632) target = $region92
        $region91: #{tpu_custom_call.1} parent=79 // pred_region
          %p635 = scmp.lt.s32.totalorder %s39, 1
          %s636 = scalar_select %p635, %s39, 1
          %s637 = scalar_lea.vmem %s2, %s636
        $region92: #{tpu_custom_call.1} parent=79 // pred_fallthru
          _
      $region80: #{tpu_custom_call.1} parent=5 // pred_fallthru
        _
      %p638 = scmp.le.s32.totalorder 1, %s32
      %p639 = scmp.lt.s32.totalorder %s32, 3
      %p640 = pnand %p638, %p639
      %p641 = pneg %p640
      // Predicated region
      $region93: #{tpu_custom_call.1} parent=5 // pred_check
        _
      $region94: #{tpu_custom_call.1} parent=5 // pred_check_branch
        %643 = sbr.rel (%p640) target = $region96
      $region95: #{tpu_custom_call.1} parent=5 // pred_region
        %s644 = ssub.s32 %s32, 1
        // Predicated region
        $region97: #{tpu_custom_call.1} parent=95 // pred_check
          %p645 = pneg %p145
        $region98: #{tpu_custom_call.1} parent=95 // pred_check_branch
          %647 = sbr.rel (%p645) target = $region100
        $region99: #{tpu_custom_call.1} parent=95 // pred_region
          %648 = dma.done [#allocation5], 1024
        $region100: #{tpu_custom_call.1} parent=95 // pred_fallthru
          _
        // Predicated region
        $region101: #{tpu_custom_call.1} parent=95 // pred_check
          %p649 = pneg %p187
        $region102: #{tpu_custom_call.1} parent=95 // pred_check_branch
          %651 = sbr.rel (%p649) target = $region104
        $region103: #{tpu_custom_call.1} parent=95 // pred_region
          %652 = dma.done [#allocation8], 1024
        $region104: #{tpu_custom_call.1} parent=95 // pred_fallthru
          _
        // Predicated region
        $region105: #{tpu_custom_call.1} parent=95 // pred_check
          %p653 = pneg %p229
        $region106: #{tpu_custom_call.1} parent=95 // pred_check_branch
          %655 = sbr.rel (%p653) target = $region108
        $region107: #{tpu_custom_call.1} parent=95 // pred_region
          %656 = dma.done [#allocation8], 1024
        $region108: #{tpu_custom_call.1} parent=95 // pred_fallthru
          _
        // Predicated region
        $region109: #{tpu_custom_call.1} parent=95 // pred_check
          %p657 = pneg %p271
        $region110: #{tpu_custom_call.1} parent=95 // pred_check_branch
          %659 = sbr.rel (%p657) target = $region112
        $region111: #{tpu_custom_call.1} parent=95 // pred_region
          %660 = dma.done [#allocation11], 1024
        $region112: #{tpu_custom_call.1} parent=95 // pred_fallthru
          _
        // Predicated region
        $region113: #{tpu_custom_call.1} parent=95 // pred_check
          %p661 = pneg %p355
        $region114: #{tpu_custom_call.1} parent=95 // pred_check_branch
          %663 = sbr.rel (%p661) target = $region116
        $region115: #{tpu_custom_call.1} parent=95 // pred_region
          %664 = dma.done [#allocation11], 1024
        $region116: #{tpu_custom_call.1} parent=95 // pred_fallthru
          _
        // Predicated region
        $region117: #{tpu_custom_call.1} parent=95 // pred_check
          %p665 = pneg %p397
        $region118: #{tpu_custom_call.1} parent=95 // pred_check_branch
          %667 = sbr.rel (%p665) target = $region120
        $region119: #{tpu_custom_call.1} parent=95 // pred_region
          %668 = dma.done [#allocation14], 1024
        $region120: #{tpu_custom_call.1} parent=95 // pred_fallthru
          _
        %p669 = scmp.lt.s32.totalorder %s41, 1
        %s670 = scalar_select %p669, %s41, 1
        %s671 = smul.addr %s670, 4
        %s672 = scalar_lea.vmem %s0, %s671
        %p673 = pneg %p70
        %p674 = pneg %p67
        %p675 = scmp.lt.s32.totalorder %s41, 1
        %s676 = scalar_select %p675, %s41, 1
        %p677 = scmp.lt.s32.totalorder %s42, 0
        %s678 = scalar_select %p677, %s42, 0
        %s679 = sadd.s32 %s678, %s676
        %s680 = smul.addr %s679, 8
        %s681 = scalar_lea.vmem %s1, %s680
        %p682 = pneg %p98
        %p683 = pneg %p95
        %p684 = scmp.lt.s32.totalorder %s41, 1
        %s685 = scalar_select %p684, %s41, 1
        %s686 = scalar_lea.vmem %s2, %s685
        %p687 = pneg %p124
        %p688 = pneg %p121
        %p689 = pneg %p145
        %p690 = pneg %p142
        %p691 = pneg %p166
        %p692 = pneg %p163
        %p693 = pneg %p187
        %p694 = pneg %p184
        %p695 = pneg %p208
        %p696 = pneg %p205
        %p697 = pneg %p229
        %p698 = pneg %p226
        %p699 = pneg %p250
        %p700 = pneg %p247
        %p701 = pneg %p271
        %p702 = pneg %p268
        %p703 = pneg %p292
        %p704 = pneg %p289
        %p705 = pneg %p313
        %p706 = pneg %p310
        %p707 = pneg %p334
        %p708 = pneg %p331
        %p709 = pneg %p355
        %p710 = pneg %p352
        %p711 = pneg %p376
        %p712 = pneg %p373
        %p713 = pneg %p397
        %p714 = pneg %p394
        %p715 = pneg %p418
        %p716 = pneg %p415
        %p717 = pneg %p439
        %p718 = pneg %p436
        %p719 = pneg %p460
        %p720 = pneg %p457
        %p721 = pneg %p488
        %p722 = pneg %p485
        %s723 = sand.u32 %s475, 1
        %s724 = scalar_lea.sflag [#allocation6], %s723
        %s725 = sand.u32 %s475, 1
        %s726 = smul.addr %s725, 4
        %s727 = scalar_lea.vmem [#allocation15], %s726
        %p728 = scmp.lt.s32.totalorder %s41, 1
        %s729 = scalar_select %p728, %s41, 1
        %s730 = smul.addr %s729, 4
        %s731 = scalar_lea.vmem %s0, %s730
        %p732 = scmp.lt.s32.totalorder %s41, 1
        %s733 = scalar_select %p732, %s41, 1
        %p734 = scmp.lt.s32.totalorder %s42, 0
        %s735 = scalar_select %p734, %s42, 0
        %s736 = sadd.s32 %s735, %s733
        %s737 = smul.addr %s736, 8
        %s738 = scalar_lea.vmem %s1, %s737
        %p739 = scmp.lt.s32.totalorder %s41, 1
        %s740 = scalar_select %p739, %s41, 1
        %s741 = scalar_lea.vmem %s2, %s740
        %p743 = scmp.eq.s32.totalorder %s42, 0
        // Predicated region
        $region121: #{tpu_custom_call.1} parent=95 // pred_check
          %p744 = pneg %p743
        $region122: #{tpu_custom_call.1} parent=95 // pred_check_branch
          %746 = sbr.rel (%p744) target = $region124
        $region123: #{tpu_custom_call.1} parent=95 // pred_region
          %v747 = vld [vmem:[%s731] sm:$0xf]
          %v748 = vld [vmem:[#allocation7] sm:$0xf]
          %v749 = vld [vmem:[#allocation7 + $0x4] sm:$0xf]
          %v750 = vld [vmem:[#allocation7 + $0x8] sm:$0xf]
          %v751 = vld [vmem:[#allocation7 + $0xc] sm:$0xf]
          %v752 = vld [vmem:[#allocation7 + $0x10] sm:$0xf]
          %v753 = vld [vmem:[#allocation7 + $0x14] sm:$0xf]
          %v754 = vld [vmem:[#allocation7 + $0x18] sm:$0xf]
          %v755 = vld [vmem:[#allocation7 + $0x1c] sm:$0xf]
          %v756 = vld [vmem:[#allocation7 + $0x20] sm:$0xf]
          %v757 = vld [vmem:[#allocation7 + $0x24] sm:$0xf]
          %v758 = vld [vmem:[#allocation7 + $0x28] sm:$0xf]
          %v759 = vld [vmem:[#allocation7 + $0x2c] sm:$0xf]
          %v760 = vld [vmem:[#allocation7 + $0x30] sm:$0xf]
          %v761 = vld [vmem:[#allocation7 + $0x34] sm:$0xf]
          %v762 = vld [vmem:[#allocation7 + $0x38] sm:$0xf]
          %v763 = vld [vmem:[#allocation7 + $0x3c] sm:$0xf]
          %v764 = vld [vmem:[%s6] sm:$0x1]
          %v766 = vlaneseq
          %v767 = vshrl.u32 %v766, 7
          %v768 = vsub.s32 0, %v767
          %v769 = vrot.slane %v764, %v768
          %v787 = vunpack.c.l.b16 %v748
          %v788 = vunpack.c.l.b16 %v749
          %v789 = vunpack.c.l.b16 %v750
          %v790 = vunpack.c.l.b16 %v751
          %v791 = vunpack.c.l.b16 %v752
          %v792 = vunpack.c.l.b16 %v753
          %v793 = vunpack.c.l.b16 %v754
          %v794 = vunpack.c.l.b16 %v755
          %v795 = vunpack.c.l.b16 %v756
          %v796 = vunpack.c.l.b16 %v757
          %v797 = vunpack.c.l.b16 %v758
          %v798 = vunpack.c.l.b16 %v759
          %v799 = vunpack.c.l.b16 %v760
          %v800 = vunpack.c.l.b16 %v761
          %v801 = vunpack.c.l.b16 %v762
          %v802 = vunpack.c.l.b16 %v763
          %v803 = vpack.c.b16 %v788, %v787
          %v804 = vpack.c.b16 %v790, %v789
          %v805 = vpack.c.b16 %v792, %v791
          %v806 = vpack.c.b16 %v794, %v793
          %v807 = vpack.c.b16 %v796, %v795
          %v808 = vpack.c.b16 %v798, %v797
          %v809 = vpack.c.b16 %v800, %v799
          %v810 = vpack.c.b16 %v802, %v801
          %819 = vmatprep.subr.bf16.mxu0 0
          %820 = vmatpush1.bf16.msra.mxu0 %v810
          %821 = vmatprep.subr.bf16.mxu0 0
          %822 = vmatpush1.bf16.msra.mxu0 %v809
          %823 = vmatprep.subr.bf16.mxu0 0
          %824 = vmatpush1.bf16.msra.mxu0 %v808
          %825 = vmatprep.subr.bf16.mxu0 0
          %826 = vmatpush1.bf16.msra.mxu0 %v807
          %827 = vmatprep.subr.bf16.mxu0 0
          %828 = vmatpush1.bf16.msra.mxu0 %v806
          %829 = vmatprep.subr.bf16.mxu0 0
          %830 = vmatpush1.bf16.msra.mxu0 %v805
          %831 = vmatprep.subr.bf16.mxu0 0
          %832 = vmatpush1.bf16.msra.mxu0 %v804
          %833 = vmatprep.subr.bf16.mxu0 0
          %834 = vmatpush1.bf16.msra.mxu0 %v803
          %835 = vmatprep.subr.bf16.mxu0 0
          %836 = vmatpush2.bf16.msra.mxu0 0
          %837 = vmatprep.subr.bf16.mxu0 0
          %838 = vmatpush2.bf16.msra.mxu0 0
          %839 = vmatprep.subr.bf16.mxu0 0
          %840 = vmatpush2.bf16.msra.mxu0 0
          %841 = vmatprep.subr.bf16.mxu0 0
          %842 = vmatpush2.bf16.msra.mxu0 0
          %843 = vmatprep.subr.bf16.mxu0 0
          %844 = vmatpush2.bf16.msra.mxu0 0
          %845 = vmatprep.subr.bf16.mxu0 0
          %846 = vmatpush2.bf16.msra.mxu0 0
          %847 = vmatprep.subr.bf16.mxu0 0
          %848 = vmatpush2.bf16.msra.mxu0 0
          %849 = vmatprep.subr.bf16.mxu0 0
          %850 = vmatpush2.bf16.msra.mxu0 0
          %851 = vmatprep.mubr.bf16.mxu0 0
          %852 = vmatmul.mubr.bf16.gmra.mxu0 %v747
          %v853 = vpop.f32.mrf.mxu0
          %v854 = vadd.f32 %v769, %v853
          %v855 = vpop.f32.mrf.mxu0
          %v856 = vpop.f32.mrf.mxu0
          %v857 = vpop.f32.mrf.mxu0
          %858 = vdwg.mxu0
          %v859 = vld [vmem:[#allocation9] sm:$0xf]
          %v860 = vld [vmem:[#allocation9 + $0x4] sm:$0xf]
          %v861 = vld [vmem:[#allocation9 + $0x8] sm:$0xf]
          %v862 = vld [vmem:[#allocation9 + $0xc] sm:$0xf]
          %v863 = vld [vmem:[#allocation9 + $0x10] sm:$0xf]
          %v864 = vld [vmem:[#allocation9 + $0x14] sm:$0xf]
          %v865 = vld [vmem:[#allocation9 + $0x18] sm:$0xf]
          %v866 = vld [vmem:[#allocation9 + $0x1c] sm:$0xf]
          %v867 = vld [vmem:[#allocation9 + $0x20] sm:$0xf]
          %v868 = vld [vmem:[#allocation9 + $0x24] sm:$0xf]
          %v869 = vld [vmem:[#allocation9 + $0x28] sm:$0xf]
          %v870 = vld [vmem:[#allocation9 + $0x2c] sm:$0xf]
          %v871 = vld [vmem:[#allocation9 + $0x30] sm:$0xf]
          %v872 = vld [vmem:[#allocation9 + $0x34] sm:$0xf]
          %v873 = vld [vmem:[#allocation9 + $0x38] sm:$0xf]
          %v874 = vld [vmem:[#allocation9 + $0x3c] sm:$0xf]
          %v875 = vld [vmem:[%s8] sm:$0x1]
          %v877 = vlaneseq
          %v878 = vshrl.u32 %v877, 7
          %v879 = vsub.s32 0, %v878
          %v880 = vrot.slane %v875, %v879
          %v898 = vunpack.c.l.b16 %v859
          %v899 = vunpack.c.l.b16 %v860
          %v900 = vunpack.c.l.b16 %v861
          %v901 = vunpack.c.l.b16 %v862
          %v902 = vunpack.c.l.b16 %v863
          %v903 = vunpack.c.l.b16 %v864
          %v904 = vunpack.c.l.b16 %v865
          %v905 = vunpack.c.l.b16 %v866
          %v906 = vunpack.c.l.b16 %v867
          %v907 = vunpack.c.l.b16 %v868
          %v908 = vunpack.c.l.b16 %v869
          %v909 = vunpack.c.l.b16 %v870
          %v910 = vunpack.c.l.b16 %v871
          %v911 = vunpack.c.l.b16 %v872
          %v912 = vunpack.c.l.b16 %v873
          %v913 = vunpack.c.l.b16 %v874
          %v914 = vpack.c.b16 %v899, %v898
          %v915 = vpack.c.b16 %v901, %v900
          %v916 = vpack.c.b16 %v903, %v902
          %v917 = vpack.c.b16 %v905, %v904
          %v918 = vpack.c.b16 %v907, %v906
          %v919 = vpack.c.b16 %v909, %v908
          %v920 = vpack.c.b16 %v911, %v910
          %v921 = vpack.c.b16 %v913, %v912
          %930 = vmatprep.subr.bf16.mxu0 0
          %931 = vmatpush1.bf16.msra.mxu0 %v921
          %932 = vmatprep.subr.bf16.mxu0 0
          %933 = vmatpush1.bf16.msra.mxu0 %v920
          %934 = vmatprep.subr.bf16.mxu0 0
          %935 = vmatpush1.bf16.msra.mxu0 %v919
          %936 = vmatprep.subr.bf16.mxu0 0
          %937 = vmatpush1.bf16.msra.mxu0 %v918
          %938 = vmatprep.subr.bf16.mxu0 0
          %939 = vmatpush1.bf16.msra.mxu0 %v917
          %940 = vmatprep.subr.bf16.mxu0 0
          %941 = vmatpush1.bf16.msra.mxu0 %v916
          %942 = vmatprep.subr.bf16.mxu0 0
          %943 = vmatpush1.bf16.msra.mxu0 %v915
          %944 = vmatprep.subr.bf16.mxu0 0
          %945 = vmatpush1.bf16.msra.mxu0 %v914
          %946 = vmatprep.subr.bf16.mxu0 0
          %947 = vmatpush2.bf16.msra.mxu0 0
          %948 = vmatprep.subr.bf16.mxu0 0
          %949 = vmatpush2.bf16.msra.mxu0 0
          %950 = vmatprep.subr.bf16.mxu0 0
          %951 = vmatpush2.bf16.msra.mxu0 0
          %952 = vmatprep.subr.bf16.mxu0 0
          %953 = vmatpush2.bf16.msra.mxu0 0
          %954 = vmatprep.subr.bf16.mxu0 0
          %955 = vmatpush2.bf16.msra.mxu0 0
          %956 = vmatprep.subr.bf16.mxu0 0
          %957 = vmatpush2.bf16.msra.mxu0 0
          %958 = vmatprep.subr.bf16.mxu0 0
          %959 = vmatpush2.bf16.msra.mxu0 0
          %960 = vmatprep.subr.bf16.mxu0 0
          %961 = vmatpush2.bf16.msra.mxu0 0
          %962 = vmatprep.mubr.bf16.mxu0 0
          %963 = vmatmul.mubr.bf16.gmra.mxu0 %v747
          %v964 = vpop.f32.mrf.mxu0
          %v965 = vadd.f32 %v880, %v964
          %v966 = vpop.f32.mrf.mxu0
          %v967 = vpop.f32.mrf.mxu0
          %v968 = vpop.f32.mrf.mxu0
          %969 = vdwg.mxu0
          %v970 = vpack.c.bf16 %v854, %v854
          %971 = vst [vmem:[#allocation2] sm:$0xf] %v970
          %v972 = vpack.c.bf16 %v965, %v965
          %973 = vst [vmem:[#allocation3] sm:$0xf] %v972
        $region124: #{tpu_custom_call.1} parent=95 // pred_fallthru
          _
        %s974 = smul.u32 %s42, 8
        %s975 = sshra.s32 %s974, 3
        %s976 = sand.u32 %s974, 7
        %s977 = smul.addr %s975, 4
        %s978 = scalar_lea.vmem %s731, %s977
        %v979 = vld [vmem:[%s978] sm:$0xf]
        %v980 = vunpack.c.l.bf16 %v979
        %v981 = vld [vmem:[#allocation4] sm:$0xf]
        %v982 = vld [vmem:[#allocation4 + $0x4] sm:$0xf]
        %v983 = vld [vmem:[#allocation4 + $0x8] sm:$0xf]
        %v984 = vld [vmem:[#allocation4 + $0xc] sm:$0xf]
        %v985 = vld [vmem:[#allocation4 + $0x10] sm:$0xf]
        %v986 = vld [vmem:[#allocation4 + $0x14] sm:$0xf]
        %v987 = vld [vmem:[#allocation4 + $0x18] sm:$0xf]
        %v988 = vld [vmem:[#allocation4 + $0x1c] sm:$0xf]
        %v989 = vld [vmem:[#allocation4 + $0x20] sm:$0xf]
        %v990 = vld [vmem:[#allocation4 + $0x24] sm:$0xf]
        %v991 = vld [vmem:[#allocation4 + $0x28] sm:$0xf]
        %v992 = vld [vmem:[#allocation4 + $0x2c] sm:$0xf]
        %v993 = vld [vmem:[#allocation4 + $0x30] sm:$0xf]
        %v994 = vld [vmem:[#allocation4 + $0x34] sm:$0xf]
        %v995 = vld [vmem:[#allocation4 + $0x38] sm:$0xf]
        %v996 = vld [vmem:[#allocation4 + $0x3c] sm:$0xf]
        %v997 = vld [vmem:[%s4] sm:$0x1]
        %v999 = vlaneseq
        %v1000 = vshrl.u32 %v999, 7
        %v1001 = vsub.s32 0, %v1000
        %v1002 = vrot.slane %v997, %v1001
        %v1020 = vunpack.c.l.b16 %v981
        %v1021 = vunpack.c.l.b16 %v982
        %v1022 = vunpack.c.l.b16 %v983
        %v1023 = vunpack.c.l.b16 %v984
        %v1024 = vunpack.c.l.b16 %v985
        %v1025 = vunpack.c.l.b16 %v986
        %v1026 = vunpack.c.l.b16 %v987
        %v1027 = vunpack.c.l.b16 %v988
        %v1028 = vunpack.c.l.b16 %v989
        %v1029 = vunpack.c.l.b16 %v990
        %v1030 = vunpack.c.l.b16 %v991
        %v1031 = vunpack.c.l.b16 %v992
        %v1032 = vunpack.c.l.b16 %v993
        %v1033 = vunpack.c.l.b16 %v994
        %v1034 = vunpack.c.l.b16 %v995
        %v1035 = vunpack.c.l.b16 %v996
        %v1036 = vpack.c.b16 %v1021, %v1020
        %v1037 = vpack.c.b16 %v1023, %v1022
        %v1038 = vpack.c.b16 %v1025, %v1024
        %v1039 = vpack.c.b16 %v1027, %v1026
        %v1040 = vpack.c.b16 %v1029, %v1028
        %v1041 = vpack.c.b16 %v1031, %v1030
        %v1042 = vpack.c.b16 %v1033, %v1032
        %v1043 = vpack.c.b16 %v1035, %v1034
        %1052 = vmatprep.subr.bf16.mxu0 0
        %1053 = vmatpush1.bf16.msra.mxu0 %v1043
        %1054 = vmatprep.subr.bf16.mxu0 0
        %1055 = vmatpush1.bf16.msra.mxu0 %v1042
        %1056 = vmatprep.subr.bf16.mxu0 0
        %1057 = vmatpush1.bf16.msra.mxu0 %v1041
        %1058 = vmatprep.subr.bf16.mxu0 0
        %1059 = vmatpush1.bf16.msra.mxu0 %v1040
        %1060 = vmatprep.subr.bf16.mxu0 0
        %1061 = vmatpush1.bf16.msra.mxu0 %v1039
        %1062 = vmatprep.subr.bf16.mxu0 0
        %1063 = vmatpush1.bf16.msra.mxu0 %v1038
        %1064 = vmatprep.subr.bf16.mxu0 0
        %1065 = vmatpush1.bf16.msra.mxu0 %v1037
        %1066 = vmatprep.subr.bf16.mxu0 0
        %1067 = vmatpush1.bf16.msra.mxu0 %v1036
        %1068 = vmatprep.subr.bf16.mxu0 0
        %1069 = vmatpush2.bf16.msra.mxu0 0
        %1070 = vmatprep.subr.bf16.mxu0 0
        %1071 = vmatpush2.bf16.msra.mxu0 0
        %1072 = vmatprep.subr.bf16.mxu0 0
        %1073 = vmatpush2.bf16.msra.mxu0 0
        %1074 = vmatprep.subr.bf16.mxu0 0
        %1075 = vmatpush2.bf16.msra.mxu0 0
        %1076 = vmatprep.subr.bf16.mxu0 0
        %1077 = vmatpush2.bf16.msra.mxu0 0
        %1078 = vmatprep.subr.bf16.mxu0 0
        %1079 = vmatpush2.bf16.msra.mxu0 0
        %1080 = vmatprep.subr.bf16.mxu0 0
        %1081 = vmatpush2.bf16.msra.mxu0 0
        %1082 = vmatprep.subr.bf16.mxu0 0
        %1083 = vmatpush2.bf16.msra.mxu0 0
        %1084 = vmatprep.mubr.bf16.mxu0 0
        %1085 = vmatmul.mubr.bf16.gmra.mxu0 %v979
        %v1086 = vpop.f32.mrf.mxu0
        %v1087 = vadd.f32 %v1002, %v1086
        %v1088 = vpop.f32.mrf.mxu0
        %v1089 = vpop.f32.mrf.mxu0
        %v1090 = vpop.f32.mrf.mxu0
        %1091 = vdwg.mxu0
        %v1092 = vpack.c.bf16 %v1087, %v1087
        %v1093 = vld [vmem:[#allocation2] sm:$0xf]
        %v1094 = vld [vmem:[#allocation3] sm:$0xf]
        %v1095 = vld [vmem:[%s741] sm:$0x1]
        %vm1096 = vcmask 130048
        %v1098 = vsel %vm1096, %v1092, 0
        %v1101 = vsel %vm1096, %v1093, 0
        %1103 = vmatprep.subr.bf16.mxu0 0
        %1104 = vmatpush1.bf16.xpose.msra.mxu0 0
        %1105 = vmatprep.subr.bf16.mxu0 0
        %1106 = vmatpush1.bf16.xpose.msra.mxu0 0
        %1107 = vmatprep.subr.bf16.mxu0 0
        %1108 = vmatpush1.bf16.xpose.msra.mxu0 0
        %1109 = vmatprep.subr.bf16.mxu0 0
        %1110 = vmatpush1.bf16.xpose.msra.mxu0 0
        %1111 = vmatprep.subr.bf16.mxu0 0
        %1112 = vmatpush1.bf16.xpose.msra.mxu0 0
        %1113 = vmatprep.subr.bf16.mxu0 0
        %1114 = vmatpush1.bf16.xpose.msra.mxu0 0
        %1115 = vmatprep.subr.bf16.mxu0 0
        %1116 = vmatpush1.bf16.xpose.msra.mxu0 0
        %1117 = vmatprep.subr.bf16.mxu0 0
        %1118 = vmatpush1.bf16.xpose.msra.mxu0 %v1101
        %1119 = vmatprep.subr.bf16.mxu0 0
        %1120 = vmatpush2.bf16.xpose.msra.mxu0 0
        %1121 = vmatprep.subr.bf16.mxu0 0
        %1122 = vmatpush2.bf16.xpose.msra.mxu0 0
        %1123 = vmatprep.subr.bf16.mxu0 0
        %1124 = vmatpush2.bf16.xpose.msra.mxu0 0
        %1125 = vmatprep.subr.bf16.mxu0 0
        %1126 = vmatpush2.bf16.xpose.msra.mxu0 0
        %1127 = vmatprep.subr.bf16.mxu0 0
        %1128 = vmatpush2.bf16.xpose.msra.mxu0 0
        %1129 = vmatprep.subr.bf16.mxu0 0
        %1130 = vmatpush2.bf16.xpose.msra.mxu0 0
        %1131 = vmatprep.subr.bf16.mxu0 0
        %1132 = vmatpush2.bf16.xpose.msra.mxu0 0
        %1133 = vmatprep.subr.bf16.mxu0 0
        %1134 = vmatpush2.bf16.xpose.msra.mxu0 0
        %1135 = vmatprep.mubr.bf16.mxu0 0
        %1136 = vmatmul.mubr.bf16.gmra.mxu0 %v1098
        %v1137 = vpop.f32.mrf.mxu0
        %v1138 = vadd.f32 0.0, %v1137
        %v1139 = vpop.f32.mrf.mxu0
        %v1140 = vpop.f32.mrf.mxu0
        %v1141 = vpop.f32.mrf.mxu0
        %1142 = vdwg.mxu0
        %v1143 = vmul.f32 %v1138, 0.25
        %v1145 = vlaneseq
        %v1146 = vshrl.u32 %v1145, 7
        %v1147 = vsub.s32 0, %v1146
        %v1148 = vrot.slane %v1095, %v1147
        %v1150 = vadd.f32 %v1143, %v1148
        %vm1151 = vcmask 64512
        %v1152 = vsel %vm1151, %v1150, -inf
        %1153 = vmax.xlane.f32.xlu0 %v1152
        %v1154 = vpop.xlane.xlu0 %1153
        %v1155 = vsub.f32 %v1150, %v1154
        %v1156 = vmul.f32 %v1155, 1.442695
        %v1157 = vpow.pop %v1156
        %v1158 = vsel %vm1151, %v1157, 0.0
        %1159 = vadd.xlane.f32.xlu0 %v1158
        %v1160 = vpop.xlane.xlu0 %1159
        %v1161 = vrcp.pop %v1160
        %v1162 = vmul.f32 %v1157, %v1161
        %v1163 = vpack.c.bf16 %v1162, %v1162
        %v1165 = vsel %vm1151, %v1163, 0
        %vm1167 = vcmask 1043456
        %v1169 = vsel %vm1167, %v1094, 0
        %1171 = vmatprep.subr.bf16.mxu0 0
        %1172 = vmatpush1.bf16.msra.mxu0 0
        %1173 = vmatprep.subr.bf16.mxu0 0
        %1174 = vmatpush1.bf16.msra.mxu0 0
        %1175 = vmatprep.subr.bf16.mxu0 0
        %1176 = vmatpush1.bf16.msra.mxu0 0
        %1177 = vmatprep.subr.bf16.mxu0 0
        %1178 = vmatpush1.bf16.msra.mxu0 0
        %1179 = vmatprep.subr.bf16.mxu0 0
        %1180 = vmatpush1.bf16.msra.mxu0 0
        %1181 = vmatprep.subr.bf16.mxu0 0
        %1182 = vmatpush1.bf16.msra.mxu0 0
        %1183 = vmatprep.subr.bf16.mxu0 0
        %1184 = vmatpush1.bf16.msra.mxu0 0
        %1185 = vmatprep.subr.bf16.mxu0 0
        %1186 = vmatpush1.bf16.msra.mxu0 %v1169
        %1187 = vmatprep.subr.bf16.mxu0 0
        %1188 = vmatpush2.bf16.msra.mxu0 0
        %1189 = vmatprep.subr.bf16.mxu0 0
        %1190 = vmatpush2.bf16.msra.mxu0 0
        %1191 = vmatprep.subr.bf16.mxu0 0
        %1192 = vmatpush2.bf16.msra.mxu0 0
        %1193 = vmatprep.subr.bf16.mxu0 0
        %1194 = vmatpush2.bf16.msra.mxu0 0
        %1195 = vmatprep.subr.bf16.mxu0 0
        %1196 = vmatpush2.bf16.msra.mxu0 0
        %1197 = vmatprep.subr.bf16.mxu0 0
        %1198 = vmatpush2.bf16.msra.mxu0 0
        %1199 = vmatprep.subr.bf16.mxu0 0
        %1200 = vmatpush2.bf16.msra.mxu0 0
        %1201 = vmatprep.subr.bf16.mxu0 0
        %1202 = vmatpush2.bf16.msra.mxu0 0
        %1203 = vmatprep.mubr.bf16.mxu0 0
        %1204 = vmatmul.mubr.bf16.gmra.mxu0 %v1165
        %v1205 = vpop.f32.mrf.mxu0
        %v1206 = vadd.f32 0.0, %v1205
        %v1207 = vpop.f32.mrf.mxu0
        %v1208 = vpop.f32.mrf.mxu0
        %v1209 = vpop.f32.mrf.mxu0
        %1210 = vdwg.mxu0
        %v1211 = vpack.c.bf16 %v1206, %v1206
        %1213 = vrot.lane.b32.xlu0 %v1092, 112
        %v1214 = vpop.permute.xlu0 %1213
        %v1216 = vunpack.c.l.b16 %v1093
        %v1217 = vpack.c.b16 %v1216, %v1216
        %1218 = vrot.lane.b32.xlu0 %v1217, 112
        %v1219 = vpop.permute.xlu0 %1218
        %v1221 = vsel %vm1096, %v1214, 0
        %v1224 = vsel %vm1096, %v1219, 0
        %1226 = vmatprep.subr.bf16.mxu0 0
        %1227 = vmatpush1.bf16.xpose.msra.mxu0 0
        %1228 = vmatprep.subr.bf16.mxu0 0
        %1229 = vmatpush1.bf16.xpose.msra.mxu0 0
        %1230 = vmatprep.subr.bf16.mxu0 0
        %1231 = vmatpush1.bf16.xpose.msra.mxu0 0
        %1232 = vmatprep.subr.bf16.mxu0 0
        %1233 = vmatpush1.bf16.xpose.msra.mxu0 0
        %1234 = vmatprep.subr.bf16.mxu0 0
        %1235 = vmatpush1.bf16.xpose.msra.mxu0 0
        %1236 = vmatprep.subr.bf16.mxu0 0
        %1237 = vmatpush1.bf16.xpose.msra.mxu0 0
        %1238 = vmatprep.subr.bf16.mxu0 0
        %1239 = vmatpush1.bf16.xpose.msra.mxu0 0
        %1240 = vmatprep.subr.bf16.mxu0 0
        %1241 = vmatpush1.bf16.xpose.msra.mxu0 %v1224
        %1242 = vmatprep.subr.bf16.mxu0 0
        %1243 = vmatpush2.bf16.xpose.msra.mxu0 0
        %1244 = vmatprep.subr.bf16.mxu0 0
        %1245 = vmatpush2.bf16.xpose.msra.mxu0 0
        %1246 = vmatprep.subr.bf16.mxu0 0
        %1247 = vmatpush2.bf16.xpose.msra.mxu0 0
        %1248 = vmatprep.subr.bf16.mxu0 0
        %1249 = vmatpush2.bf16.xpose.msra.mxu0 0
        %1250 = vmatprep.subr.bf16.mxu0 0
        %1251 = vmatpush2.bf16.xpose.msra.mxu0 0
        %1252 = vmatprep.subr.bf16.mxu0 0
        %1253 = vmatpush2.bf16.xpose.msra.mxu0 0
        %1254 = vmatprep.subr.bf16.mxu0 0
        %1255 = vmatpush2.bf16.xpose.msra.mxu0 0
        %1256 = vmatprep.subr.bf16.mxu0 0
        %1257 = vmatpush2.bf16.xpose.msra.mxu0 0
        %1258 = vmatprep.mubr.bf16.mxu0 0
        %1259 = vmatmul.mubr.bf16.gmra.mxu0 %v1221
        %v1260 = vpop.f32.mrf.mxu0
        %v1261 = vadd.f32 0.0, %v1260
        %v1262 = vpop.f32.mrf.mxu0
        %v1263 = vpop.f32.mrf.mxu0
        %v1264 = vpop.f32.mrf.mxu0
        %1265 = vdwg.mxu0
        %v1266 = vmul.f32 %v1261, 0.25
        %v1267 = vadd.f32 %v1266, %v1148
        %v1268 = vsel %vm1151, %v1267, -inf
        %1269 = vmax.xlane.f32.xlu0 %v1268
        %v1270 = vpop.xlane.xlu0 %1269
        %v1271 = vsub.f32 %v1267, %v1270
        %v1272 = vmul.f32 %v1271, 1.442695
        %v1273 = vpow.pop %v1272
        %v1274 = vsel %vm1151, %v1273, 0.0
        %1275 = vadd.xlane.f32.xlu0 %v1274
        %v1276 = vpop.xlane.xlu0 %1275
        %v1277 = vrcp.pop %v1276
        %v1278 = vmul.f32 %v1273, %v1277
        %v1279 = vpack.c.bf16 %v1278, %v1278
        %v1281 = vunpack.c.l.b16 %v1094
        %v1282 = vpack.c.b16 %v1281, %v1281
        %1283 = vrot.lane.b32.xlu0 %v1282, 112
        %v1284 = vpop.permute.xlu0 %1283
        %v1286 = vsel %vm1151, %v1279, 0
        %v1289 = vsel %vm1167, %v1284, 0
        %1291 = vmatprep.subr.bf16.mxu0 0
        %1292 = vmatpush1.bf16.msra.mxu0 0
        %1293 = vmatprep.subr.bf16.mxu0 0
        %1294 = vmatpush1.bf16.msra.mxu0 0
        %1295 = vmatprep.subr.bf16.mxu0 0
        %1296 = vmatpush1.bf16.msra.mxu0 0
        %1297 = vmatprep.subr.bf16.mxu0 0
        %1298 = vmatpush1.bf16.msra.mxu0 0
        %1299 = vmatprep.subr.bf16.mxu0 0
        %1300 = vmatpush1.bf16.msra.mxu0 0
        %1301 = vmatprep.subr.bf16.mxu0 0
        %1302 = vmatpush1.bf16.msra.mxu0 0
        %1303 = vmatprep.subr.bf16.mxu0 0
        %1304 = vmatpush1.bf16.msra.mxu0 0
        %1305 = vmatprep.subr.bf16.mxu0 0
        %1306 = vmatpush1.bf16.msra.mxu0 %v1289
        %1307 = vmatprep.subr.bf16.mxu0 0
        %1308 = vmatpush2.bf16.msra.mxu0 0
        %1309 = vmatprep.subr.bf16.mxu0 0
        %1310 = vmatpush2.bf16.msra.mxu0 0
        %1311 = vmatprep.subr.bf16.mxu0 0
        %1312 = vmatpush2.bf16.msra.mxu0 0
        %1313 = vmatprep.subr.bf16.mxu0 0
        %1314 = vmatpush2.bf16.msra.mxu0 0
        %1315 = vmatprep.subr.bf16.mxu0 0
        %1316 = vmatpush2.bf16.msra.mxu0 0
        %1317 = vmatprep.subr.bf16.mxu0 0
        %1318 = vmatpush2.bf16.msra.mxu0 0
        %1319 = vmatprep.subr.bf16.mxu0 0
        %1320 = vmatpush2.bf16.msra.mxu0 0
        %1321 = vmatprep.subr.bf16.mxu0 0
        %1322 = vmatpush2.bf16.msra.mxu0 0
        %1323 = vmatprep.mubr.bf16.mxu0 0
        %1324 = vmatmul.mubr.bf16.gmra.mxu0 %v1286
        %v1325 = vpop.f32.mrf.mxu0
        %v1326 = vadd.f32 0.0, %v1325
        %v1327 = vpop.f32.mrf.mxu0
        %v1328 = vpop.f32.mrf.mxu0
        %v1329 = vpop.f32.mrf.mxu0
        %1330 = vdwg.mxu0
        %v1331 = vpack.c.bf16 %v1326, %v1326
        %1333 = vrot.lane.b32.xlu0 %v1331, 16
        %v1334 = vpop.permute.xlu0 %1333
        %v1337 = vsel %vm1096, %v1211, %v1334
        %vm1338 = vcmask 261120
        %v1340 = vsel %vm1338, %v1337, 0
        %v1342 = vld [vmem:[#allocation10] sm:$0xf]
        %v1343 = vld [vmem:[#allocation10 + $0x4] sm:$0xf]
        %v1344 = vld [vmem:[#allocation10 + $0x8] sm:$0xf]
        %v1345 = vld [vmem:[#allocation10 + $0xc] sm:$0xf]
        %v1346 = vld [vmem:[#allocation10 + $0x10] sm:$0xf]
        %v1347 = vld [vmem:[#allocation10 + $0x14] sm:$0xf]
        %v1348 = vld [vmem:[#allocation10 + $0x18] sm:$0xf]
        %v1349 = vld [vmem:[#allocation10 + $0x1c] sm:$0xf]
        %v1350 = vld [vmem:[#allocation10 + $0x20] sm:$0xf]
        %v1351 = vld [vmem:[#allocation10 + $0x24] sm:$0xf]
        %v1352 = vld [vmem:[#allocation10 + $0x28] sm:$0xf]
        %v1353 = vld [vmem:[#allocation10 + $0x2c] sm:$0xf]
        %v1354 = vld [vmem:[#allocation10 + $0x30] sm:$0xf]
        %v1355 = vld [vmem:[#allocation10 + $0x34] sm:$0xf]
        %v1356 = vld [vmem:[#allocation10 + $0x38] sm:$0xf]
        %v1357 = vld [vmem:[#allocation10 + $0x3c] sm:$0xf]
        %v1358 = vld [vmem:[%s10] sm:$0x1]
        %v1360 = vlaneseq
        %v1361 = vshrl.u32 %v1360, 7
        %v1362 = vsub.s32 0, %v1361
        %v1363 = vrot.slane %v1358, %v1362
        %v1381 = vunpack.c.l.b16 %v1342
        %v1382 = vunpack.c.l.b16 %v1343
        %v1383 = vunpack.c.l.b16 %v1344
        %v1384 = vunpack.c.l.b16 %v1345
        %v1385 = vunpack.c.l.b16 %v1346
        %v1386 = vunpack.c.l.b16 %v1347
        %v1387 = vunpack.c.l.b16 %v1348
        %v1388 = vunpack.c.l.b16 %v1349
        %v1389 = vunpack.c.l.b16 %v1350
        %v1390 = vunpack.c.l.b16 %v1351
        %v1391 = vunpack.c.l.b16 %v1352
        %v1392 = vunpack.c.l.b16 %v1353
        %v1393 = vunpack.c.l.b16 %v1354
        %v1394 = vunpack.c.l.b16 %v1355
        %v1395 = vunpack.c.l.b16 %v1356
        %v1396 = vunpack.c.l.b16 %v1357
        %v1397 = vpack.c.b16 %v1382, %v1381
        %v1398 = vpack.c.b16 %v1384, %v1383
        %v1399 = vpack.c.b16 %v1386, %v1385
        %v1400 = vpack.c.b16 %v1388, %v1387
        %v1401 = vpack.c.b16 %v1390, %v1389
        %v1402 = vpack.c.b16 %v1392, %v1391
        %v1403 = vpack.c.b16 %v1394, %v1393
        %v1404 = vpack.c.b16 %v1396, %v1395
        %1413 = vmatprep.subr.bf16.mxu0 0
        %1414 = vmatpush1.bf16.msra.mxu0 %v1404
        %1415 = vmatprep.subr.bf16.mxu0 0
        %1416 = vmatpush1.bf16.msra.mxu0 %v1403
        %1417 = vmatprep.subr.bf16.mxu0 0
        %1418 = vmatpush1.bf16.msra.mxu0 %v1402
        %1419 = vmatprep.subr.bf16.mxu0 0
        %1420 = vmatpush1.bf16.msra.mxu0 %v1401
        %1421 = vmatprep.subr.bf16.mxu0 0
        %1422 = vmatpush1.bf16.msra.mxu0 %v1400
        %1423 = vmatprep.subr.bf16.mxu0 0
        %1424 = vmatpush1.bf16.msra.mxu0 %v1399
        %1425 = vmatprep.subr.bf16.mxu0 0
        %1426 = vmatpush1.bf16.msra.mxu0 %v1398
        %1427 = vmatprep.subr.bf16.mxu0 0
        %1428 = vmatpush1.bf16.msra.mxu0 %v1397
        %1429 = vmatprep.subr.bf16.mxu0 0
        %1430 = vmatpush2.bf16.msra.mxu0 0
        %1431 = vmatprep.subr.bf16.mxu0 0
        %1432 = vmatpush2.bf16.msra.mxu0 0
        %1433 = vmatprep.subr.bf16.mxu0 0
        %1434 = vmatpush2.bf16.msra.mxu0 0
        %1435 = vmatprep.subr.bf16.mxu0 0
        %1436 = vmatpush2.bf16.msra.mxu0 0
        %1437 = vmatprep.subr.bf16.mxu0 0
        %1438 = vmatpush2.bf16.msra.mxu0 0
        %1439 = vmatprep.subr.bf16.mxu0 0
        %1440 = vmatpush2.bf16.msra.mxu0 0
        %1441 = vmatprep.subr.bf16.mxu0 0
        %1442 = vmatpush2.bf16.msra.mxu0 0
        %1443 = vmatprep.subr.bf16.mxu0 0
        %1444 = vmatpush2.bf16.msra.mxu0 0
        %1445 = vmatprep.mubr.bf16.mxu0 0
        %1446 = vmatmul.mubr.bf16.gmra.mxu0 %v1340
        %v1447 = vpop.f32.mrf.mxu0
        %v1448 = vadd.f32 %v1363, %v1447
        %v1449 = vpop.f32.mrf.mxu0
        %v1450 = vpop.f32.mrf.mxu0
        %v1451 = vpop.f32.mrf.mxu0
        %1452 = vdwg.mxu0
        %v1453 = vlaneseq
        %v1454 = vand.u32 %v1453, 127
        %vm1455 = vcmp.lt.s32.totalorder %v1454, 32
        %v1456 = vsel %vm1455, 1, 0
        %v1457 = vcvt.s32.f32 %v1456
        %v1458 = vld [vmem:[%s738] sm:$0xff]
        %v1459 = vadd.f32 %v1448, %v980
        %v1460 = vld [vmem:[%s11] sm:$0x1]
        %v1461 = vld [vmem:[%s12] sm:$0x1]
        %1462 = vadd.xlane.f32.xlu0 %v1459
        %v1463 = vpop.xlane.xlu0 %1462
        %v1464 = vmul.f32 %v1463, 0.03125
        %v1465 = vsub.f32 %v1459, %v1464
        %v1466 = vmul.f32 %v1465, %v1457
        %v1467 = vmul.f32 %v1466, %v1466
        %1468 = vadd.xlane.f32.xlu0 %v1467
        %v1469 = vpop.xlane.xlu0 %1468
        %v1470 = vmul.f32 %v1469, 0.03125
        %v1471 = vadd.f32 %v1470, 1e-05
        %v1472 = vrsqrt.pop %v1471
        %v1473 = vmul.f32 %v1466, %v1472
        %v1475 = vlaneseq
        %v1476 = vshrl.u32 %v1475, 7
        %v1477 = vsub.s32 0, %v1476
        %v1478 = vrot.slane %v1460, %v1477
        %v1480 = vmul.f32 %v1473, %v1478
        %v1482 = vlaneseq
        %v1483 = vshrl.u32 %v1482, 7
        %v1484 = vsub.s32 0, %v1483
        %v1485 = vrot.slane %v1461, %v1484
        %v1487 = vadd.f32 %v1480, %v1485
        %1489 = vset.pattern.permute.xlu0 0
        %1490 = vperm.xlu0 %1489, %v1458
        %v1491 = vpop.permute.xlu0 %1490
        %v1493 = vmul.f32 %v1487, %v1491
        %v1494 = vpack.c.bf16 %v1493, %v1493
        %v1495 = vld [vmem:[#allocation12] sm:$0xf]
        %v1496 = vld [vmem:[#allocation12 + $0x4] sm:$0xf]
        %v1497 = vld [vmem:[#allocation12 + $0x8] sm:$0xf]
        %v1498 = vld [vmem:[#allocation12 + $0xc] sm:$0xf]
        %v1499 = vld [vmem:[#allocation12 + $0x10] sm:$0xf]
        %v1500 = vld [vmem:[#allocation12 + $0x14] sm:$0xf]
        %v1501 = vld [vmem:[#allocation12 + $0x18] sm:$0xf]
        %v1502 = vld [vmem:[#allocation12 + $0x1c] sm:$0xf]
        %v1503 = vld [vmem:[#allocation12 + $0x20] sm:$0xf]
        %v1504 = vld [vmem:[#allocation12 + $0x24] sm:$0xf]
        %v1505 = vld [vmem:[#allocation12 + $0x28] sm:$0xf]
        %v1506 = vld [vmem:[#allocation12 + $0x2c] sm:$0xf]
        %v1507 = vld [vmem:[#allocation12 + $0x30] sm:$0xf]
        %v1508 = vld [vmem:[#allocation12 + $0x34] sm:$0xf]
        %v1509 = vld [vmem:[#allocation12 + $0x38] sm:$0xf]
        %v1510 = vld [vmem:[#allocation12 + $0x3c] sm:$0xf]
        %v1511 = vld [vmem:[%s14] sm:$0x1]
        %v1513 = vlaneseq
        %v1514 = vshrl.u32 %v1513, 7
        %v1515 = vsub.s32 0, %v1514
        %v1516 = vrot.slane %v1511, %v1515
        %v1534 = vunpack.c.l.b16 %v1495
        %v1535 = vunpack.c.l.b16 %v1496
        %v1536 = vunpack.c.l.b16 %v1497
        %v1537 = vunpack.c.l.b16 %v1498
        %v1538 = vunpack.c.l.b16 %v1499
        %v1539 = vunpack.c.l.b16 %v1500
        %v1540 = vunpack.c.l.b16 %v1501
        %v1541 = vunpack.c.l.b16 %v1502
        %v1542 = vunpack.c.l.b16 %v1503
        %v1543 = vunpack.c.l.b16 %v1504
        %v1544 = vunpack.c.l.b16 %v1505
        %v1545 = vunpack.c.l.b16 %v1506
        %v1546 = vunpack.c.l.b16 %v1507
        %v1547 = vunpack.c.l.b16 %v1508
        %v1548 = vunpack.c.l.b16 %v1509
        %v1549 = vunpack.c.l.b16 %v1510
        %v1550 = vpack.c.b16 %v1535, %v1534
        %v1551 = vpack.c.b16 %v1537, %v1536
        %v1552 = vpack.c.b16 %v1539, %v1538
        %v1553 = vpack.c.b16 %v1541, %v1540
        %v1554 = vpack.c.b16 %v1543, %v1542
        %v1555 = vpack.c.b16 %v1545, %v1544
        %v1556 = vpack.c.b16 %v1547, %v1546
        %v1557 = vpack.c.b16 %v1549, %v1548
        %1566 = vmatprep.subr.bf16.mxu0 0
        %1567 = vmatpush1.bf16.msra.mxu0 %v1557
        %1568 = vmatprep.subr.bf16.mxu0 0
        %1569 = vmatpush1.bf16.msra.mxu0 %v1556
        %1570 = vmatprep.subr.bf16.mxu0 0
        %1571 = vmatpush1.bf16.msra.mxu0 %v1555
        %1572 = vmatprep.subr.bf16.mxu0 0
        %1573 = vmatpush1.bf16.msra.mxu0 %v1554
        %1574 = vmatprep.subr.bf16.mxu0 0
        %1575 = vmatpush1.bf16.msra.mxu0 %v1553
        %1576 = vmatprep.subr.bf16.mxu0 0
        %1577 = vmatpush1.bf16.msra.mxu0 %v1552
        %1578 = vmatprep.subr.bf16.mxu0 0
        %1579 = vmatpush1.bf16.msra.mxu0 %v1551
        %1580 = vmatprep.subr.bf16.mxu0 0
        %1581 = vmatpush1.bf16.msra.mxu0 %v1550
        %1582 = vmatprep.subr.bf16.mxu0 0
        %1583 = vmatpush2.bf16.msra.mxu0 0
        %1584 = vmatprep.subr.bf16.mxu0 0
        %1585 = vmatpush2.bf16.msra.mxu0 0
        %1586 = vmatprep.subr.bf16.mxu0 0
        %1587 = vmatpush2.bf16.msra.mxu0 0
        %1588 = vmatprep.subr.bf16.mxu0 0
        %1589 = vmatpush2.bf16.msra.mxu0 0
        %1590 = vmatprep.subr.bf16.mxu0 0
        %1591 = vmatpush2.bf16.msra.mxu0 0
        %1592 = vmatprep.subr.bf16.mxu0 0
        %1593 = vmatpush2.bf16.msra.mxu0 0
        %1594 = vmatprep.subr.bf16.mxu0 0
        %1595 = vmatpush2.bf16.msra.mxu0 0
        %1596 = vmatprep.subr.bf16.mxu0 0
        %1597 = vmatpush2.bf16.msra.mxu0 0
        %1598 = vmatprep.mubr.bf16.mxu0 0
        %1599 = vmatmul.mubr.bf16.gmra.mxu0 %v1494
        %v1600 = vpop.f32.mrf.mxu0
        %v1601 = vadd.f32 %v1516, %v1600
        %v1602 = vpop.f32.mrf.mxu0
        %v1603 = vpop.f32.mrf.mxu0
        %v1604 = vpop.f32.mrf.mxu0
        %1605 = vdwg.mxu0
        %v1606 = vmax.f32 %v1601, 0.0
        %v1607 = vpack.c.bf16 %v1606, %v1606
        %v1608 = vld [vmem:[#allocation13] sm:$0xf]
        %v1609 = vld [vmem:[#allocation13 + $0x4] sm:$0xf]
        %v1610 = vld [vmem:[#allocation13 + $0x8] sm:$0xf]
        %v1611 = vld [vmem:[#allocation13 + $0xc] sm:$0xf]
        %v1612 = vld [vmem:[#allocation13 + $0x10] sm:$0xf]
        %v1613 = vld [vmem:[#allocation13 + $0x14] sm:$0xf]
        %v1614 = vld [vmem:[#allocation13 + $0x18] sm:$0xf]
        %v1615 = vld [vmem:[#allocation13 + $0x1c] sm:$0xf]
        %v1616 = vld [vmem:[#allocation13 + $0x20] sm:$0xf]
        %v1617 = vld [vmem:[#allocation13 + $0x24] sm:$0xf]
        %v1618 = vld [vmem:[#allocation13 + $0x28] sm:$0xf]
        %v1619 = vld [vmem:[#allocation13 + $0x2c] sm:$0xf]
        %v1620 = vld [vmem:[#allocation13 + $0x30] sm:$0xf]
        %v1621 = vld [vmem:[#allocation13 + $0x34] sm:$0xf]
        %v1622 = vld [vmem:[#allocation13 + $0x38] sm:$0xf]
        %v1623 = vld [vmem:[#allocation13 + $0x3c] sm:$0xf]
        %v1624 = vld [vmem:[%s16] sm:$0x1]
        %v1626 = vlaneseq
        %v1627 = vshrl.u32 %v1626, 7
        %v1628 = vsub.s32 0, %v1627
        %v1629 = vrot.slane %v1624, %v1628
        %v1647 = vunpack.c.l.b16 %v1608
        %v1648 = vunpack.c.l.b16 %v1609
        %v1649 = vunpack.c.l.b16 %v1610
        %v1650 = vunpack.c.l.b16 %v1611
        %v1651 = vunpack.c.l.b16 %v1612
        %v1652 = vunpack.c.l.b16 %v1613
        %v1653 = vunpack.c.l.b16 %v1614
        %v1654 = vunpack.c.l.b16 %v1615
        %v1655 = vunpack.c.l.b16 %v1616
        %v1656 = vunpack.c.l.b16 %v1617
        %v1657 = vunpack.c.l.b16 %v1618
        %v1658 = vunpack.c.l.b16 %v1619
        %v1659 = vunpack.c.l.b16 %v1620
        %v1660 = vunpack.c.l.b16 %v1621
        %v1661 = vunpack.c.l.b16 %v1622
        %v1662 = vunpack.c.l.b16 %v1623
        %v1663 = vpack.c.b16 %v1648, %v1647
        %v1664 = vpack.c.b16 %v1650, %v1649
        %v1665 = vpack.c.b16 %v1652, %v1651
        %v1666 = vpack.c.b16 %v1654, %v1653
        %v1667 = vpack.c.b16 %v1656, %v1655
        %v1668 = vpack.c.b16 %v1658, %v1657
        %v1669 = vpack.c.b16 %v1660, %v1659
        %v1670 = vpack.c.b16 %v1662, %v1661
        %1679 = vmatprep.subr.bf16.mxu0 0
        %1680 = vmatpush1.bf16.msra.mxu0 %v1670
        %1681 = vmatprep.subr.bf16.mxu0 0
        %1682 = vmatpush1.bf16.msra.mxu0 %v1669
        %1683 = vmatprep.subr.bf16.mxu0 0
        %1684 = vmatpush1.bf16.msra.mxu0 %v1668
        %1685 = vmatprep.subr.bf16.mxu0 0
        %1686 = vmatpush1.bf16.msra.mxu0 %v1667
        %1687 = vmatprep.subr.bf16.mxu0 0
        %1688 = vmatpush1.bf16.msra.mxu0 %v1666
        %1689 = vmatprep.subr.bf16.mxu0 0
        %1690 = vmatpush1.bf16.msra.mxu0 %v1665
        %1691 = vmatprep.subr.bf16.mxu0 0
        %1692 = vmatpush1.bf16.msra.mxu0 %v1664
        %1693 = vmatprep.subr.bf16.mxu0 0
        %1694 = vmatpush1.bf16.msra.mxu0 %v1663
        %1695 = vmatprep.subr.bf16.mxu0 0
        %1696 = vmatpush2.bf16.msra.mxu0 0
        %1697 = vmatprep.subr.bf16.mxu0 0
        %1698 = vmatpush2.bf16.msra.mxu0 0
        %1699 = vmatprep.subr.bf16.mxu0 0
        %1700 = vmatpush2.bf16.msra.mxu0 0
        %1701 = vmatprep.subr.bf16.mxu0 0
        %1702 = vmatpush2.bf16.msra.mxu0 0
        %1703 = vmatprep.subr.bf16.mxu0 0
        %1704 = vmatpush2.bf16.msra.mxu0 0
        %1705 = vmatprep.subr.bf16.mxu0 0
        %1706 = vmatpush2.bf16.msra.mxu0 0
        %1707 = vmatprep.subr.bf16.mxu0 0
        %1708 = vmatpush2.bf16.msra.mxu0 0
        %1709 = vmatprep.subr.bf16.mxu0 0
        %1710 = vmatpush2.bf16.msra.mxu0 0
        %1711 = vmatprep.mubr.bf16.mxu0 0
        %1712 = vmatmul.mubr.bf16.gmra.mxu0 %v1607
        %v1713 = vpop.f32.mrf.mxu0
        %v1714 = vadd.f32 %v1629, %v1713
        %v1715 = vpop.f32.mrf.mxu0
        %v1716 = vpop.f32.mrf.mxu0
        %v1717 = vpop.f32.mrf.mxu0
        %1718 = vdwg.mxu0
        %v1719 = vadd.f32 %v1714, %v1493
        %v1720 = vld [vmem:[%s17] sm:$0x1]
        %v1721 = vld [vmem:[%s18] sm:$0x1]
        %1722 = vadd.xlane.f32.xlu0 %v1719
        %v1723 = vpop.xlane.xlu0 %1722
        %v1724 = vmul.f32 %v1723, 0.03125
        %v1725 = vsub.f32 %v1719, %v1724
        %v1726 = vmul.f32 %v1725, %v1457
        %v1727 = vmul.f32 %v1726, %v1726
        %1728 = vadd.xlane.f32.xlu0 %v1727
        %v1729 = vpop.xlane.xlu0 %1728
        %v1730 = vmul.f32 %v1729, 0.03125
        %v1731 = vadd.f32 %v1730, 1e-05
        %v1732 = vrsqrt.pop %v1731
        %v1733 = vmul.f32 %v1726, %v1732
        %v1735 = vlaneseq
        %v1736 = vshrl.u32 %v1735, 7
        %v1737 = vsub.s32 0, %v1736
        %v1738 = vrot.slane %v1720, %v1737
        %v1740 = vmul.f32 %v1733, %v1738
        %v1742 = vlaneseq
        %v1743 = vshrl.u32 %v1742, 7
        %v1744 = vsub.s32 0, %v1743
        %v1745 = vrot.slane %v1721, %v1744
        %v1747 = vadd.f32 %v1740, %v1745
        %v1748 = vmul.f32 %v1747, %v1491
        %v1749 = vpack.c.bf16 %v1748, %v1748
        %1750 = vst [vmem:[%s727] sm:$0xf] %v1749
        %s1751 = sand.u32 %s475, 1
        %s1752 = scalar_lea.sflag [#allocation6], %s1751
        %s1753 = sand.u32 %s475, 1
        %s1754 = smul.addr %s1753, 4
        %s1755 = scalar_lea.vmem [#allocation15], %s1754
        // Predicated region
        $region125: #{tpu_custom_call.1} parent=95 // pred_check
          %p1756 = pneg %p485
        $region126: #{tpu_custom_call.1} parent=95 // pred_check_branch
          %1758 = sbr.rel (%p1756) target = $region128
        $region127: #{tpu_custom_call.1} parent=95 // pred_region
          %s1760 = ssub.s32 64, 64
          %1761 = vsyncadd %s1752, %s1760
          %s1762 = sadd.s32 %s42, %s41
          %s1763 = smul.addr %s1762, 64
          %s1764 = scalar_lea.hbm %s19, %s1763
          %s1766 = sshll.u32 %s1755, 4
          %s1767 = int_to_ptr.vmem [resolvable:$true] %s1766
          %1769 = dma.vmem_to_hbm [thread:$0]  %s1767, 64, %s1764, %s1752
        $region128: #{tpu_custom_call.1} parent=95 // pred_fallthru
          _
      $region96: #{tpu_custom_call.1} parent=5 // pred_fallthru
        _
      %p1770 = scmp.le.s32.totalorder 2, %s32
      // Predicated region
      $region129: #{tpu_custom_call.1} parent=5 // pred_check
        %p1771 = pneg %p1770
      $region130: #{tpu_custom_call.1} parent=5 // pred_check_branch
        %1773 = sbr.rel (%p1771) target = $region132
      $region131: #{tpu_custom_call.1} parent=5 // pred_region
        %s1774 = ssub.s32 %s32, 2
        // Predicated region
        $region133: #{tpu_custom_call.1} parent=131 // pred_check
          %p1775 = pneg %p491
        $region134: #{tpu_custom_call.1} parent=131 // pred_check_branch
          %1777 = sbr.rel (%p1775) target = $region136
        $region135: #{tpu_custom_call.1} parent=131 // pred_region
          %s1778 = sand.u32 %s476, 1
          %s1779 = scalar_lea.sflag [#allocation6], %s1778
          %s1780 = sand.u32 %s476, 1
          %s1781 = smul.addr %s1780, 4
          %s1782 = scalar_lea.vmem [#allocation15], %s1781
          %1783 = dma.done %s1779, 64
        $region136: #{tpu_custom_call.1} parent=131 // pred_fallthru
          _
      $region132: #{tpu_custom_call.1} parent=5 // pred_fallthru
        _
    $region6: #{tpu_custom_call.1} parent=1 // loop_footer
      %s36 = sadd.s32 1, %s32
    $region7: #{tpu_custom_call.1} parent=1 // loop_footer_branch
      %31 = sbr.rel target = $region3
    $region8: #{tpu_custom_call.1} parent=1 // loop_exit
      _
    %1784 = vsyncpa [#allocation5], 1
    %s1785 = scalar_lea.sflag [#allocation5], 1
    %1786 = vsyncpa %s1785, 1
    %1787 = vsyncpa [#allocation8], 1
    %1788 = vsyncpa [#allocation11], 1
    %1789 = vsyncpa [#allocation14], 1
    %1790 = vsyncpa [#allocation6], 1
    %s1791 = scalar_lea.sflag [#allocation6], 1
    %1792 = vsyncpa %s1791, 1

</llo_original>
